<compile_context>
chip_gen: v5e
topology: v5e:2x2
jax: 0.10.0
libtpu: 0.0.40
codegen_flags: <defaults>
</compile_context>

<pallas_src>
import functools
import numpy as np

import jax
import jax.numpy as jnp
from jax.experimental import pallas as pl
from jax.experimental.pallas import tpu as pltpu

LANE = 128
NEG_SLOPE = 0.2
KSIZE = 4


# ----------------------------------------------------------------------------
# Fused kernel: per layer, 4 accumulated matmuls against banded weights.
# ----------------------------------------------------------------------------
def _disc_fused_kernel(x_ref, *refs, layers, neg_slope):
    n_layers = len(layers)
    wb_refs = refs[: 2 * n_layers]            # (w1, b1, ..., w5, b5)
    o_ref = refs[2 * n_layers]                # (Ho_f, Wo_f * Cout_pad)
    scratches = refs[2 * n_layers + 1:]       # activation buffers, layers 1..4

    # Border-only zeroing: just the top/bottom zero-pad rows of each scratch.
    # The interior is fully overwritten every step and the horizontal padding
    # is encoded in the banded weights, so nothing else needs initialisation.
    for l in range(n_layers - 1):
        ho, wo, cout = layers[l]
        zero_row = jnp.zeros((1, wo * cout), jnp.float32)
        scratches[l][0:1, :] = zero_row
        scratches[l][ho + 1:ho + 2, :] = zero_row

    in_ref = x_ref                            # (H_in + 2, W_in * C_in)
    for l in range(n_layers):
        ho, wo, cout = layers[l]
        w_ref = wb_refs[2 * l]                # (4, W_in*C_in, Wo*Cout)
        b_ref = wb_refs[2 * l + 1]            # (1, Wo*Cout)

        acc = None
        for kh in range(KSIZE):
            # Stride-2 row slab for this kh tap; lanes already hold (W, C).
            lhs = in_ref[pl.ds(kh, ho, stride=2), :]          # (Ho, W_in*C_in)
            part = jnp.dot(lhs, w_ref[kh],
                           preferred_element_type=jnp.float32)
            acc = part if acc is None else acc + part
        y = acc + b_ref[...]                                   # (Ho, Wo*Cout)

        if l < n_layers - 1:
            y = jnp.where(y >= 0.0, y, neg_slope * y)          # LeakyReLU(0.2)
            scratches[l][1:ho + 1, :] = y                      # one interior store
            in_ref = scratches[l]
        else:
            o_ref[...] = y                                     # lane-dense store


# ----------------------------------------------------------------------------
# Host-side: build the per-kh banded weight matrices (stride-2 conv along W,
# padding=1 folded in by dropping the pad-column rows).
# ----------------------------------------------------------------------------
def _build_banded_weight(wgt_oihw, bias, w_in, w_out, cout_pad):
    """Returns (4, w_in*cin, w_out*cout_pad) banded weights and (1, w_out*cout_pad) bias."""
    cout, cin = wgt_oihw.shape[0], wgt_oihw.shape[1]
    w = jnp.transpose(wgt_oihw, (2, 3, 1, 0)).astype(jnp.float32)   # (kh, kw, ci, co)
    b = bias.astype(jnp.float32)
    if cout_pad > cout:
        w = jnp.pad(w, ((0, 0), (0, 0), (0, 0), (0, cout_pad - cout)))
        b = jnp.pad(b, (0, cout_pad - cout))

    wp = w_in + 2                                # padded width (pad rows dropped below)
    per_kh = []
    for kh in range(KSIZE):
        blk = w[kh].reshape(KSIZE * cin, cout_pad)        # row index = kw*cin + ci
        cols = []
        for j in range(w_out):
            top = 2 * j * cin
            bot = (wp - 2 * j - KSIZE) * cin
            cols.append(jnp.pad(blk, ((top, bot), (0, 0))))
        wb = jnp.concatenate(cols, axis=1)                # (wp*cin, w_out*cout_pad)
        per_kh.append(wb[cin:(w_in + 1) * cin, :])        # drop W zero-pad rows
    w_banded = jnp.stack(per_kh, axis=0)                  # (4, w_in*cin, w_out*cout_pad)
    b_row = jnp.tile(b, (w_out,)).reshape(1, w_out * cout_pad)
    return w_banded, b_row


# ----------------------------------------------------------------------------
# Wrapper: layout glue + pallas_call
# ----------------------------------------------------------------------------
def model_discriminate_forward(x_nchw, params):
    """x_nchw: (N, C, H, W) f32; params: list of (w_oihw, b). Returns NCHW logits."""
    N, C0, H, W = x_nchw.shape
    n_layers = len(params)

    # Per-layer geometry for k=4, s=2, p=1.
    geoms = []
    h_in, w_in, c_in = H, W, C0
    for wgt, _ in params:
        c_out = wgt.shape[0]
        h_out = (h_in + 2 - KSIZE) // 2 + 1
        w_out = (w_in + 2 - KSIZE) // 2 + 1
        assert h_out >= 1 and w_out >= 1, "input too small for 5 stride-2 convs"
        geoms.append((h_in, w_in, c_in, h_out, w_out, c_out))
        h_in, w_in, c_in = h_out, w_out, c_out

    # NCHW -> NHWC, pad H only (W padding lives in the banded weights),
    # flatten (W, C) into one lane-dense last dim.
    x_nhwc = jnp.transpose(x_nchw, (0, 2, 3, 1)).astype(jnp.float32)
    xp = jnp.pad(x_nhwc, ((0, 0), (1, 1), (0, 0), (0, 0)))      # (N, H+2, W, C0)
    xp = xp.reshape(N, H + 2, W * C0)

    flat_inputs = [xp]
    in_specs = [pl.BlockSpec((None, H + 2, W * C0), lambda n: (n, 0, 0))]

    layers = []
    flops = 0
    for l, ((wgt, bias), (hi, wi, ci, ho, wo, co)) in enumerate(zip(params, geoms)):
        co_used = max(co, LANE) if l == n_layers - 1 else co      # lane-dense output
        wbm, brow = _build_banded_weight(wgt, bias, wi, wo, co_used)
        layers.append((ho, wo, co_used))
        flat_inputs += [wbm, brow]
        in_specs += [pl.BlockSpec(wbm.shape, lambda n: (0, 0, 0)),
                     pl.BlockSpec(brow.shape, lambda n: (0, 0))]
        flops += 2 * N * KSIZE * ho * (wi * ci) * (wo * co_used)

    ho_f, wo_f, co_f = layers[-1]
    cout_real = params[-1][0].shape[0]

    out_shape = jax.ShapeDtypeStruct((N, ho_f, wo_f * co_f), jnp.float32)
    out_spec = pl.BlockSpec((None, ho_f, wo_f * co_f), lambda n: (n, 0, 0))

    # VMEM-resident padded activations for layers 1..4 (tiny: a few KB each).
    scratch_shapes = [
        pltpu.VMEM((layers[l][0] + 2, layers[l][1] * layers[l][2]), jnp.float32)
        for l in range(n_layers - 1)
    ]

    bytes_accessed = 4 * (xp.size + sum(int(a.size) for a in flat_inputs[1:])
                          + N * ho_f * wo_f * co_f)

    kernel = functools.partial(_disc_fused_kernel, layers=tuple(layers),
                               neg_slope=NEG_SLOPE)

    out = pl.pallas_call(
        kernel,
        out_shape=out_shape,
        grid_spec=pltpu.PrefetchScalarGridSpec(
            num_scalar_prefetch=0,
            grid=(N,),
            in_specs=in_specs,
            out_specs=out_spec,
            scratch_shapes=scratch_shapes,
        ),
        compiler_params=pltpu.CompilerParams(
            dimension_semantics=("parallel",),       # batch across cores on v7x
            vmem_limit_bytes=32 * 1024 * 1024,       # safe on v5e/v6e/v7x
        ),
        cost_estimate=pl.CostEstimate(flops=flops, transcendentals=0,
                                      bytes_accessed=bytes_accessed),
    )(*flat_inputs)

    # (N, Ho_f, Wo_f*Cpad) -> (N, Cout, Ho_f, Wo_f), dropping the lane padding.
    y = out.reshape(N, ho_f, wo_f, co_f)[..., :cout_real]
    return jnp.transpose(y, (0, 3, 1, 2))


# ----------------------------------------------------------------------------
# Parameters (PyTorch-like fan-in scaled uniform, deterministic)
# ----------------------------------------------------------------------------
def init_params(key, num_classes, ndf):
    chans = [
        (num_classes, ndf),
        (ndf, ndf * 2),
        (ndf * 2, ndf * 4),
        (ndf * 4, ndf * 8),
        (ndf * 8, 1),
    ]
    params = []
    for (cin, cout) in chans:
        key, kw, kb = jax.random.split(key, 3)
        bound = 1.0 / np.sqrt(cin * 4 * 4)
        w = jax.random.uniform(kw, (cout, cin, 4, 4), jnp.float32, -bound, bound)
        b = jax.random.uniform(kb, (cout,), jnp.float32, -bound, bound)
        params.append((w, b))
    return params


# ----------------------------------------------------------------------------
# Plain-JAX reference (for correctness check)
# ----------------------------------------------------------------------------
def _ref_forward(x_nchw, params):
    y = x_nchw
    n_layers = len(params)
    for i, (w, b) in enumerate(params):
        y = jax.lax.conv_general_dilated(
            y, w, window_strides=(2, 2), padding=((1, 1), (1, 1)),
            dimension_numbers=("NCHW", "OIHW", "NCHW"),
        )
        y = y + b[None, :, None, None]
        if i < n_layers - 1:
            y = jnp.where(y >= 0.0, y, 0.2 * y)
    return y


if __name__ == "__main__":
    num_classes = 4
    ndf = 8
    N, H, W = 2, 32, 32   # 32x32 so all 5 stride-2 convs are valid (-> 1x1 output)

    key = jax.random.PRNGKey(0)
    key, kx = jax.random.split(key)
    x = jax.random.normal(kx, (N, num_classes, H, W), jnp.float32)   # NCHW input

    params = init_params(key, num_classes, ndf)

    fwd = jax.jit(model_discriminate_forward)
    out = jax.block_until_ready(fwd(x, params))

    ref = jax.block_until_ready(_ref_forward(x, params))
    np.testing.assert_allclose(np.asarray(out), np.asarray(ref), rtol=1e-3, atol=1e-3)

    print("KERNEL_OK")
</pallas_src>

<mosaic_0001>
module attributes {stable_mosaic.version = 11 : i64} {
  func.func @_disc_fused_kernel(%arg0: i32, %arg1: memref<1x34x128xf32, #tpu.memory_space<vmem>>, %arg2: memref<4x128x128xf32, #tpu.memory_space<vmem>>, %arg3: memref<1x128xf32, #tpu.memory_space<vmem>>, %arg4: memref<4x128x128xf32, #tpu.memory_space<vmem>>, %arg5: memref<1x128xf32, #tpu.memory_space<vmem>>, %arg6: memref<4x128x128xf32, #tpu.memory_space<vmem>>, %arg7: memref<1x128xf32, #tpu.memory_space<vmem>>, %arg8: memref<4x128x128xf32, #tpu.memory_space<vmem>>, %arg9: memref<1x128xf32, #tpu.memory_space<vmem>>, %arg10: memref<4x128x128xf32, #tpu.memory_space<vmem>>, %arg11: memref<1x128xf32, #tpu.memory_space<vmem>>, %arg12: memref<1x1x128xf32, #tpu.memory_space<vmem>>, %arg13: memref<18x128xf32, #tpu.memory_space<vmem>>, %arg14: memref<10x128xf32, #tpu.memory_space<vmem>>, %arg15: memref<6x128xf32, #tpu.memory_space<vmem>>, %arg16: memref<4x128xf32, #tpu.memory_space<vmem>>) attributes {dimension_semantics = [#tpu.dimension_semantics<parallel>], iteration_bounds = array<i64: 2>, scalar_prefetch = 0 : i64, scratch_operands = 4 : i64, tpu.core_type = #tpu.core_type<tc>, window_params = [{transform_indices = @transform_0, window_bounds = array<i64: 1, 34, 128>}, {pipeline_mode = #tpu.pipeline_mode<synchronous>, transform_indices = @transform_1, window_bounds = array<i64: 4, 128, 128>}, {pipeline_mode = #tpu.pipeline_mode<synchronous>, transform_indices = @transform_2, window_bounds = array<i64: 1, 128>}, {pipeline_mode = #tpu.pipeline_mode<synchronous>, transform_indices = @transform_3, window_bounds = array<i64: 4, 128, 128>}, {pipeline_mode = #tpu.pipeline_mode<synchronous>, transform_indices = @transform_4, window_bounds = array<i64: 1, 128>}, {pipeline_mode = #tpu.pipeline_mode<synchronous>, transform_indices = @transform_5, window_bounds = array<i64: 4, 128, 128>}, {pipeline_mode = #tpu.pipeline_mode<synchronous>, transform_indices = @transform_6, window_bounds = array<i64: 1, 128>}, {pipeline_mode = #tpu.pipeline_mode<synchronous>, transform_indices = @transform_7, window_bounds = array<i64: 4, 128, 128>}, {pipeline_mode = #tpu.pipeline_mode<synchronous>, transform_indices = @transform_8, window_bounds = array<i64: 1, 128>}, {pipeline_mode = #tpu.pipeline_mode<synchronous>, transform_indices = @transform_9, window_bounds = array<i64: 4, 128, 128>}, {pipeline_mode = #tpu.pipeline_mode<synchronous>, transform_indices = @transform_10, window_bounds = array<i64: 1, 128>}, {transform_indices = @transform_11, window_bounds = array<i64: 1, 1, 128>}]} {
    %cst = arith.constant 0.000000e+00 : f32
    %0 = vector.broadcast %cst : f32 to vector<1x128xf32>
    %c0 = arith.constant 0 : index
    %c0_0 = arith.constant 0 : index
    %1 = vector.load %arg13[%c0, %c0_0] : memref<18x128xf32, #tpu.memory_space<vmem>>, vector<1x128xf32>
    tpu.vector_store %arg13[%c0, %c0_0], %0 {strides = array<i32>} : memref<18x128xf32, #tpu.memory_space<vmem>>, vector<1x128xf32>,
    %c17 = arith.constant 17 : index
    %c0_1 = arith.constant 0 : index
    %2 = vector.load %arg13[%c17, %c0_1] : memref<18x128xf32, #tpu.memory_space<vmem>>, vector<1x128xf32>
    tpu.vector_store %arg13[%c17, %c0_1], %0 {strides = array<i32>} : memref<18x128xf32, #tpu.memory_space<vmem>>, vector<1x128xf32>,
    %cst_2 = arith.constant 0.000000e+00 : f32
    %3 = vector.broadcast %cst_2 : f32 to vector<1x128xf32>
    %c0_3 = arith.constant 0 : index
    %c0_4 = arith.constant 0 : index
    %4 = vector.load %arg14[%c0_3, %c0_4] : memref<10x128xf32, #tpu.memory_space<vmem>>, vector<1x128xf32>
    tpu.vector_store %arg14[%c0_3, %c0_4], %3 {strides = array<i32>} : memref<10x128xf32, #tpu.memory_space<vmem>>, vector<1x128xf32>,
    %c9 = arith.constant 9 : index
    %c0_5 = arith.constant 0 : index
    %5 = vector.load %arg14[%c9, %c0_5] : memref<10x128xf32, #tpu.memory_space<vmem>>, vector<1x128xf32>
    tpu.vector_store %arg14[%c9, %c0_5], %3 {strides = array<i32>} : memref<10x128xf32, #tpu.memory_space<vmem>>, vector<1x128xf32>,
    %cst_6 = arith.constant 0.000000e+00 : f32
    %6 = vector.broadcast %cst_6 : f32 to vector<1x128xf32>
    %c0_7 = arith.constant 0 : index
    %c0_8 = arith.constant 0 : index
    %7 = vector.load %arg15[%c0_7, %c0_8] : memref<6x128xf32, #tpu.memory_space<vmem>>, vector<1x128xf32>
    tpu.vector_store %arg15[%c0_7, %c0_8], %6 {strides = array<i32>} : memref<6x128xf32, #tpu.memory_space<vmem>>, vector<1x128xf32>,
    %c5 = arith.constant 5 : index
    %c0_9 = arith.constant 0 : index
    %8 = vector.load %arg15[%c5, %c0_9] : memref<6x128xf32, #tpu.memory_space<vmem>>, vector<1x128xf32>
    tpu.vector_store %arg15[%c5, %c0_9], %6 {strides = array<i32>} : memref<6x128xf32, #tpu.memory_space<vmem>>, vector<1x128xf32>,
    %cst_10 = arith.constant 0.000000e+00 : f32
    %9 = vector.broadcast %cst_10 : f32 to vector<1x128xf32>
    %c0_11 = arith.constant 0 : index
    %c0_12 = arith.constant 0 : index
    %10 = vector.load %arg16[%c0_11, %c0_12] : memref<4x128xf32, #tpu.memory_space<vmem>>, vector<1x128xf32>
    tpu.vector_store %arg16[%c0_11, %c0_12], %9 {strides = array<i32>} : memref<4x128xf32, #tpu.memory_space<vmem>>, vector<1x128xf32>,
    %c3 = arith.constant 3 : index
    %c0_13 = arith.constant 0 : index
    %11 = vector.load %arg16[%c3, %c0_13] : memref<4x128xf32, #tpu.memory_space<vmem>>, vector<1x128xf32>
    tpu.vector_store %arg16[%c3, %c0_13], %9 {strides = array<i32>} : memref<4x128xf32, #tpu.memory_space<vmem>>, vector<1x128xf32>,
    %c0_14 = arith.constant 0 : index
    %c0_15 = arith.constant 0 : index
    %c0_16 = arith.constant 0 : index
    %12 = tpu.strided_load %arg1[%c0_14, %c0_15, %c0_16] {strides = array<i32: 1, 2, 1>} : memref<1x34x128xf32, #tpu.memory_space<vmem>>, vector<1x16x128xf32>
    %13 = vector.shape_cast %12 : vector<1x16x128xf32> to vector<16x128xf32>
    %c0_17 = arith.constant 0 : index
    %c0_18 = arith.constant 0 : index
    %c0_19 = arith.constant 0 : index
    %14 = vector.load %arg2[%c0_17, %c0_18, %c0_19] : memref<4x128x128xf32, #tpu.memory_space<vmem>>, vector<1x128x128xf32>
    %15 = vector.shape_cast %14 : vector<1x128x128xf32> to vector<128x128xf32>
    %cst_20 = arith.constant dense<0.000000e+00> : vector<16x128xf32>
    %16 = tpu.matmul %13, %15, %cst_20 {dimension_numbers = #tpu.dot_dimension_numbers<[1], [0], [0], [1], [0, 0, 1, 1], [], []>} : vector<16x128xf32>, vector<128x128xf32>, vector<16x128xf32> -> vector<16x128xf32>
    %c0_21 = arith.constant 0 : index
    %c1 = arith.constant 1 : index
    %c0_22 = arith.constant 0 : index
    %17 = tpu.strided_load %arg1[%c0_21, %c1, %c0_22] {strides = array<i32: 1, 2, 1>} : memref<1x34x128xf32, #tpu.memory_space<vmem>>, vector<1x16x128xf32>
    %18 = vector.shape_cast %17 : vector<1x16x128xf32> to vector<16x128xf32>
    %c1_23 = arith.constant 1 : index
    %c0_24 = arith.constant 0 : index
    %c0_25 = arith.constant 0 : index
    %19 = vector.load %arg2[%c1_23, %c0_24, %c0_25] : memref<4x128x128xf32, #tpu.memory_space<vmem>>, vector<1x128x128xf32>
    %20 = vector.shape_cast %19 : vector<1x128x128xf32> to vector<128x128xf32>
    %cst_26 = arith.constant dense<0.000000e+00> : vector<16x128xf32>
    %21 = tpu.matmul %18, %20, %cst_26 {dimension_numbers = #tpu.dot_dimension_numbers<[1], [0], [0], [1], [0, 0, 1, 1], [], []>} : vector<16x128xf32>, vector<128x128xf32>, vector<16x128xf32> -> vector<16x128xf32>
    %22 = arith.addf %16, %21 : vector<16x128xf32>
    %c0_27 = arith.constant 0 : index
    %c2 = arith.constant 2 : index
    %c0_28 = arith.constant 0 : index
    %23 = tpu.strided_load %arg1[%c0_27, %c2, %c0_28] {strides = array<i32: 1, 2, 1>} : memref<1x34x128xf32, #tpu.memory_space<vmem>>, vector<1x16x128xf32>
    %24 = vector.shape_cast %23 : vector<1x16x128xf32> to vector<16x128xf32>
    %c2_29 = arith.constant 2 : index
    %c0_30 = arith.constant 0 : index
    %c0_31 = arith.constant 0 : index
    %25 = vector.load %arg2[%c2_29, %c0_30, %c0_31] : memref<4x128x128xf32, #tpu.memory_space<vmem>>, vector<1x128x128xf32>
    %26 = vector.shape_cast %25 : vector<1x128x128xf32> to vector<128x128xf32>
    %cst_32 = arith.constant dense<0.000000e+00> : vector<16x128xf32>
    %27 = tpu.matmul %24, %26, %cst_32 {dimension_numbers = #tpu.dot_dimension_numbers<[1], [0], [0], [1], [0, 0, 1, 1], [], []>} : vector<16x128xf32>, vector<128x128xf32>, vector<16x128xf32> -> vector<16x128xf32>
    %28 = arith.addf %22, %27 : vector<16x128xf32>
    %c0_33 = arith.constant 0 : index
    %c3_34 = arith.constant 3 : index
    %c0_35 = arith.constant 0 : index
    %29 = tpu.strided_load %arg1[%c0_33, %c3_34, %c0_35] {strides = array<i32: 1, 2, 1>} : memref<1x34x128xf32, #tpu.memory_space<vmem>>, vector<1x16x128xf32>
    %30 = vector.shape_cast %29 : vector<1x16x128xf32> to vector<16x128xf32>
    %c3_36 = arith.constant 3 : index
    %c0_37 = arith.constant 0 : index
    %c0_38 = arith.constant 0 : index
    %31 = vector.load %arg2[%c3_36, %c0_37, %c0_38] : memref<4x128x128xf32, #tpu.memory_space<vmem>>, vector<1x128x128xf32>
    %32 = vector.shape_cast %31 : vector<1x128x128xf32> to vector<128x128xf32>
    %cst_39 = arith.constant dense<0.000000e+00> : vector<16x128xf32>
    %33 = tpu.matmul %30, %32, %cst_39 {dimension_numbers = #tpu.dot_dimension_numbers<[1], [0], [0], [1], [0, 0, 1, 1], [], []>} : vector<16x128xf32>, vector<128x128xf32>, vector<16x128xf32> -> vector<16x128xf32>
    %34 = arith.addf %28, %33 : vector<16x128xf32>
    %c0_40 = arith.constant 0 : index
    %c0_41 = arith.constant 0 : index
    %35 = vector.load %arg3[%c0_40, %c0_41] : memref<1x128xf32, #tpu.memory_space<vmem>>, vector<1x128xf32>
    %36 = vector.broadcast %35 : vector<1x128xf32> to vector<16x128xf32>
    %37 = arith.addf %34, %36 : vector<16x128xf32>
    %cst_42 = arith.constant 0.000000e+00 : f32
    %38 = vector.broadcast %cst_42 : f32 to vector<16x128xf32>
    %39 = arith.cmpf oge, %37, %38 : vector<16x128xf32>
    %cst_43 = arith.constant 2.000000e-01 : f32
    %40 = vector.broadcast %cst_43 : f32 to vector<16x128xf32>
    %41 = arith.mulf %40, %37 : vector<16x128xf32>
    %42 = arith.select %39, %37, %41 : vector<16x128xi1>, vector<16x128xf32>
    %c1_44 = arith.constant 1 : index
    %c0_45 = arith.constant 0 : index
    %43 = vector.load %arg13[%c1_44, %c0_45] : memref<18x128xf32, #tpu.memory_space<vmem>>, vector<16x128xf32>
    tpu.vector_store %arg13[%c1_44, %c0_45], %42 {strides = array<i32>} : memref<18x128xf32, #tpu.memory_space<vmem>>, vector<16x128xf32>,
    %c0_46 = arith.constant 0 : index
    %c0_47 = arith.constant 0 : index
    %44 = tpu.strided_load %arg13[%c0_46, %c0_47] {strides = array<i32: 2, 1>} : memref<18x128xf32, #tpu.memory_space<vmem>>, vector<8x128xf32>
    %c0_48 = arith.constant 0 : index
    %c0_49 = arith.constant 0 : index
    %c0_50 = arith.constant 0 : index
    %45 = vector.load %arg4[%c0_48, %c0_49, %c0_50] : memref<4x128x128xf32, #tpu.memory_space<vmem>>, vector<1x128x128xf32>
    %46 = vector.shape_cast %45 : vector<1x128x128xf32> to vector<128x128xf32>
    %cst_51 = arith.constant dense<0.000000e+00> : vector<8x128xf32>
    %47 = tpu.matmul %44, %46, %cst_51 {dimension_numbers = #tpu.dot_dimension_numbers<[1], [0], [0], [1], [0, 0, 1, 1], [], []>} : vector<8x128xf32>, vector<128x128xf32>, vector<8x128xf32> -> vector<8x128xf32>
    %c1_52 = arith.constant 1 : index
    %c0_53 = arith.constant 0 : index
    %48 = tpu.strided_load %arg13[%c1_52, %c0_53] {strides = array<i32: 2, 1>} : memref<18x128xf32, #tpu.memory_space<vmem>>, vector<8x128xf32>
    %c1_54 = arith.constant 1 : index
    %c0_55 = arith.constant 0 : index
    %c0_56 = arith.constant 0 : index
    %49 = vector.load %arg4[%c1_54, %c0_55, %c0_56] : memref<4x128x128xf32, #tpu.memory_space<vmem>>, vector<1x128x128xf32>
    %50 = vector.shape_cast %49 : vector<1x128x128xf32> to vector<128x128xf32>
    %cst_57 = arith.constant dense<0.000000e+00> : vector<8x128xf32>
    %51 = tpu.matmul %48, %50, %cst_57 {dimension_numbers = #tpu.dot_dimension_numbers<[1], [0], [0], [1], [0, 0, 1, 1], [], []>} : vector<8x128xf32>, vector<128x128xf32>, vector<8x128xf32> -> vector<8x128xf32>
    %52 = arith.addf %47, %51 : vector<8x128xf32>
    %c2_58 = arith.constant 2 : index
    %c0_59 = arith.constant 0 : index
    %53 = tpu.strided_load %arg13[%c2_58, %c0_59] {strides = array<i32: 2, 1>} : memref<18x128xf32, #tpu.memory_space<vmem>>, vector<8x128xf32>
    %c2_60 = arith.constant 2 : index
    %c0_61 = arith.constant 0 : index
    %c0_62 = arith.constant 0 : index
    %54 = vector.load %arg4[%c2_60, %c0_61, %c0_62] : memref<4x128x128xf32, #tpu.memory_space<vmem>>, vector<1x128x128xf32>
    %55 = vector.shape_cast %54 : vector<1x128x128xf32> to vector<128x128xf32>
    %cst_63 = arith.constant dense<0.000000e+00> : vector<8x128xf32>
    %56 = tpu.matmul %53, %55, %cst_63 {dimension_numbers = #tpu.dot_dimension_numbers<[1], [0], [0], [1], [0, 0, 1, 1], [], []>} : vector<8x128xf32>, vector<128x128xf32>, vector<8x128xf32> -> vector<8x128xf32>
    %57 = arith.addf %52, %56 : vector<8x128xf32>
    %c3_64 = arith.constant 3 : index
    %c0_65 = arith.constant 0 : index
    %58 = tpu.strided_load %arg13[%c3_64, %c0_65] {strides = array<i32: 2, 1>} : memref<18x128xf32, #tpu.memory_space<vmem>>, vector<8x128xf32>
    %c3_66 = arith.constant 3 : index
    %c0_67 = arith.constant 0 : index
    %c0_68 = arith.constant 0 : index
    %59 = vector.load %arg4[%c3_66, %c0_67, %c0_68] : memref<4x128x128xf32, #tpu.memory_space<vmem>>, vector<1x128x128xf32>
    %60 = vector.shape_cast %59 : vector<1x128x128xf32> to vector<128x128xf32>
    %cst_69 = arith.constant dense<0.000000e+00> : vector<8x128xf32>
    %61 = tpu.matmul %58, %60, %cst_69 {dimension_numbers = #tpu.dot_dimension_numbers<[1], [0], [0], [1], [0, 0, 1, 1], [], []>} : vector<8x128xf32>, vector<128x128xf32>, vector<8x128xf32> -> vector<8x128xf32>
    %62 = arith.addf %57, %61 : vector<8x128xf32>
    %c0_70 = arith.constant 0 : index
    %c0_71 = arith.constant 0 : index
    %63 = vector.load %arg5[%c0_70, %c0_71] : memref<1x128xf32, #tpu.memory_space<vmem>>, vector<1x128xf32>
    %64 = vector.broadcast %63 : vector<1x128xf32> to vector<8x128xf32>
    %65 = arith.addf %62, %64 : vector<8x128xf32>
    %cst_72 = arith.constant 0.000000e+00 : f32
    %66 = vector.broadcast %cst_72 : f32 to vector<8x128xf32>
    %67 = arith.cmpf oge, %65, %66 : vector<8x128xf32>
    %cst_73 = arith.constant 2.000000e-01 : f32
    %68 = vector.broadcast %cst_73 : f32 to vector<8x128xf32>
    %69 = arith.mulf %68, %65 : vector<8x128xf32>
    %70 = arith.select %67, %65, %69 : vector<8x128xi1>, vector<8x128xf32>
    %c1_74 = arith.constant 1 : index
    %c0_75 = arith.constant 0 : index
    %71 = vector.load %arg14[%c1_74, %c0_75] : memref<10x128xf32, #tpu.memory_space<vmem>>, vector<8x128xf32>
    tpu.vector_store %arg14[%c1_74, %c0_75], %70 {strides = array<i32>} : memref<10x128xf32, #tpu.memory_space<vmem>>, vector<8x128xf32>,
    %c0_76 = arith.constant 0 : index
    %c0_77 = arith.constant 0 : index
    %72 = tpu.strided_load %arg14[%c0_76, %c0_77] {strides = array<i32: 2, 1>} : memref<10x128xf32, #tpu.memory_space<vmem>>, vector<4x128xf32>
    %c0_78 = arith.constant 0 : index
    %c0_79 = arith.constant 0 : index
    %c0_80 = arith.constant 0 : index
    %73 = vector.load %arg6[%c0_78, %c0_79, %c0_80] : memref<4x128x128xf32, #tpu.memory_space<vmem>>, vector<1x128x128xf32>
    %74 = vector.shape_cast %73 : vector<1x128x128xf32> to vector<128x128xf32>
    %cst_81 = arith.constant dense<0.000000e+00> : vector<4x128xf32>
    %75 = tpu.matmul %72, %74, %cst_81 {dimension_numbers = #tpu.dot_dimension_numbers<[1], [0], [0], [1], [0, 0, 1, 1], [], []>} : vector<4x128xf32>, vector<128x128xf32>, vector<4x128xf32> -> vector<4x128xf32>
    %c1_82 = arith.constant 1 : index
    %c0_83 = arith.constant 0 : index
    %76 = tpu.strided_load %arg14[%c1_82, %c0_83] {strides = array<i32: 2, 1>} : memref<10x128xf32, #tpu.memory_space<vmem>>, vector<4x128xf32>
    %c1_84 = arith.constant 1 : index
    %c0_85 = arith.constant 0 : index
    %c0_86 = arith.constant 0 : index
    %77 = vector.load %arg6[%c1_84, %c0_85, %c0_86] : memref<4x128x128xf32, #tpu.memory_space<vmem>>, vector<1x128x128xf32>
    %78 = vector.shape_cast %77 : vector<1x128x128xf32> to vector<128x128xf32>
    %cst_87 = arith.constant dense<0.000000e+00> : vector<4x128xf32>
    %79 = tpu.matmul %76, %78, %cst_87 {dimension_numbers = #tpu.dot_dimension_numbers<[1], [0], [0], [1], [0, 0, 1, 1], [], []>} : vector<4x128xf32>, vector<128x128xf32>, vector<4x128xf32> -> vector<4x128xf32>
    %80 = arith.addf %75, %79 : vector<4x128xf32>
    %c2_88 = arith.constant 2 : index
    %c0_89 = arith.constant 0 : index
    %81 = tpu.strided_load %arg14[%c2_88, %c0_89] {strides = array<i32: 2, 1>} : memref<10x128xf32, #tpu.memory_space<vmem>>, vector<4x128xf32>
    %c2_90 = arith.constant 2 : index
    %c0_91 = arith.constant 0 : index
    %c0_92 = arith.constant 0 : index
    %82 = vector.load %arg6[%c2_90, %c0_91, %c0_92] : memref<4x128x128xf32, #tpu.memory_space<vmem>>, vector<1x128x128xf32>
    %83 = vector.shape_cast %82 : vector<1x128x128xf32> to vector<128x128xf32>
    %cst_93 = arith.constant dense<0.000000e+00> : vector<4x128xf32>
    %84 = tpu.matmul %81, %83, %cst_93 {dimension_numbers = #tpu.dot_dimension_numbers<[1], [0], [0], [1], [0, 0, 1, 1], [], []>} : vector<4x128xf32>, vector<128x128xf32>, vector<4x128xf32> -> vector<4x128xf32>
    %85 = arith.addf %80, %84 : vector<4x128xf32>
    %c3_94 = arith.constant 3 : index
    %c0_95 = arith.constant 0 : index
    %86 = tpu.strided_load %arg14[%c3_94, %c0_95] {strides = array<i32: 2, 1>} : memref<10x128xf32, #tpu.memory_space<vmem>>, vector<4x128xf32>
    %c3_96 = arith.constant 3 : index
    %c0_97 = arith.constant 0 : index
    %c0_98 = arith.constant 0 : index
    %87 = vector.load %arg6[%c3_96, %c0_97, %c0_98] : memref<4x128x128xf32, #tpu.memory_space<vmem>>, vector<1x128x128xf32>
    %88 = vector.shape_cast %87 : vector<1x128x128xf32> to vector<128x128xf32>
    %cst_99 = arith.constant dense<0.000000e+00> : vector<4x128xf32>
    %89 = tpu.matmul %86, %88, %cst_99 {dimension_numbers = #tpu.dot_dimension_numbers<[1], [0], [0], [1], [0, 0, 1, 1], [], []>} : vector<4x128xf32>, vector<128x128xf32>, vector<4x128xf32> -> vector<4x128xf32>
    %90 = arith.addf %85, %89 : vector<4x128xf32>
    %c0_100 = arith.constant 0 : index
    %c0_101 = arith.constant 0 : index
    %91 = vector.load %arg7[%c0_100, %c0_101] : memref<1x128xf32, #tpu.memory_space<vmem>>, vector<1x128xf32>
    %92 = vector.broadcast %91 : vector<1x128xf32> to vector<4x128xf32>
    %93 = arith.addf %90, %92 : vector<4x128xf32>
    %cst_102 = arith.constant 0.000000e+00 : f32
    %94 = vector.broadcast %cst_102 : f32 to vector<4x128xf32>
    %95 = arith.cmpf oge, %93, %94 : vector<4x128xf32>
    %cst_103 = arith.constant 2.000000e-01 : f32
    %96 = vector.broadcast %cst_103 : f32 to vector<4x128xf32>
    %97 = arith.mulf %96, %93 : vector<4x128xf32>
    %98 = arith.select %95, %93, %97 : vector<4x128xi1>, vector<4x128xf32>
    %c1_104 = arith.constant 1 : index
    %c0_105 = arith.constant 0 : index
    %99 = vector.load %arg15[%c1_104, %c0_105] : memref<6x128xf32, #tpu.memory_space<vmem>>, vector<4x128xf32>
    tpu.vector_store %arg15[%c1_104, %c0_105], %98 {strides = array<i32>} : memref<6x128xf32, #tpu.memory_space<vmem>>, vector<4x128xf32>,
    %c0_106 = arith.constant 0 : index
    %c0_107 = arith.constant 0 : index
    %100 = tpu.strided_load %arg15[%c0_106, %c0_107] {strides = array<i32: 2, 1>} : memref<6x128xf32, #tpu.memory_space<vmem>>, vector<2x128xf32>
    %c0_108 = arith.constant 0 : index
    %c0_109 = arith.constant 0 : index
    %c0_110 = arith.constant 0 : index
    %101 = vector.load %arg8[%c0_108, %c0_109, %c0_110] : memref<4x128x128xf32, #tpu.memory_space<vmem>>, vector<1x128x128xf32>
    %102 = vector.shape_cast %101 : vector<1x128x128xf32> to vector<128x128xf32>
    %cst_111 = arith.constant dense<0.000000e+00> : vector<2x128xf32>
    %103 = tpu.matmul %100, %102, %cst_111 {dimension_numbers = #tpu.dot_dimension_numbers<[1], [0], [0], [1], [0, 0, 1, 1], [], []>} : vector<2x128xf32>, vector<128x128xf32>, vector<2x128xf32> -> vector<2x128xf32>
    %c1_112 = arith.constant 1 : index
    %c0_113 = arith.constant 0 : index
    %104 = tpu.strided_load %arg15[%c1_112, %c0_113] {strides = array<i32: 2, 1>} : memref<6x128xf32, #tpu.memory_space<vmem>>, vector<2x128xf32>
    %c1_114 = arith.constant 1 : index
    %c0_115 = arith.constant 0 : index
    %c0_116 = arith.constant 0 : index
    %105 = vector.load %arg8[%c1_114, %c0_115, %c0_116] : memref<4x128x128xf32, #tpu.memory_space<vmem>>, vector<1x128x128xf32>
    %106 = vector.shape_cast %105 : vector<1x128x128xf32> to vector<128x128xf32>
    %cst_117 = arith.constant dense<0.000000e+00> : vector<2x128xf32>
    %107 = tpu.matmul %104, %106, %cst_117 {dimension_numbers = #tpu.dot_dimension_numbers<[1], [0], [0], [1], [0, 0, 1, 1], [], []>} : vector<2x128xf32>, vector<128x128xf32>, vector<2x128xf32> -> vector<2x128xf32>
    %108 = arith.addf %103, %107 : vector<2x128xf32>
    %c2_118 = arith.constant 2 : index
    %c0_119 = arith.constant 0 : index
    %109 = tpu.strided_load %arg15[%c2_118, %c0_119] {strides = array<i32: 2, 1>} : memref<6x128xf32, #tpu.memory_space<vmem>>, vector<2x128xf32>
    %c2_120 = arith.constant 2 : index
    %c0_121 = arith.constant 0 : index
    %c0_122 = arith.constant 0 : index
    %110 = vector.load %arg8[%c2_120, %c0_121, %c0_122] : memref<4x128x128xf32, #tpu.memory_space<vmem>>, vector<1x128x128xf32>
    %111 = vector.shape_cast %110 : vector<1x128x128xf32> to vector<128x128xf32>
    %cst_123 = arith.constant dense<0.000000e+00> : vector<2x128xf32>
    %112 = tpu.matmul %109, %111, %cst_123 {dimension_numbers = #tpu.dot_dimension_numbers<[1], [0], [0], [1], [0, 0, 1, 1], [], []>} : vector<2x128xf32>, vector<128x128xf32>, vector<2x128xf32> -> vector<2x128xf32>
    %113 = arith.addf %108, %112 : vector<2x128xf32>
    %c3_124 = arith.constant 3 : index
    %c0_125 = arith.constant 0 : index
    %114 = tpu.strided_load %arg15[%c3_124, %c0_125] {strides = array<i32: 2, 1>} : memref<6x128xf32, #tpu.memory_space<vmem>>, vector<2x128xf32>
    %c3_126 = arith.constant 3 : index
    %c0_127 = arith.constant 0 : index
    %c0_128 = arith.constant 0 : index
    %115 = vector.load %arg8[%c3_126, %c0_127, %c0_128] : memref<4x128x128xf32, #tpu.memory_space<vmem>>, vector<1x128x128xf32>
    %116 = vector.shape_cast %115 : vector<1x128x128xf32> to vector<128x128xf32>
    %cst_129 = arith.constant dense<0.000000e+00> : vector<2x128xf32>
    %117 = tpu.matmul %114, %116, %cst_129 {dimension_numbers = #tpu.dot_dimension_numbers<[1], [0], [0], [1], [0, 0, 1, 1], [], []>} : vector<2x128xf32>, vector<128x128xf32>, vector<2x128xf32> -> vector<2x128xf32>
    %118 = arith.addf %113, %117 : vector<2x128xf32>
    %c0_130 = arith.constant 0 : index
    %c0_131 = arith.constant 0 : index
    %119 = vector.load %arg9[%c0_130, %c0_131] : memref<1x128xf32, #tpu.memory_space<vmem>>, vector<1x128xf32>
    %120 = vector.broadcast %119 : vector<1x128xf32> to vector<2x128xf32>
    %121 = arith.addf %118, %120 : vector<2x128xf32>
    %cst_132 = arith.constant 0.000000e+00 : f32
    %122 = vector.broadcast %cst_132 : f32 to vector<2x128xf32>
    %123 = arith.cmpf oge, %121, %122 : vector<2x128xf32>
    %cst_133 = arith.constant 2.000000e-01 : f32
    %124 = vector.broadcast %cst_133 : f32 to vector<2x128xf32>
    %125 = arith.mulf %124, %121 : vector<2x128xf32>
    %126 = arith.select %123, %121, %125 : vector<2x128xi1>, vector<2x128xf32>
    %c1_134 = arith.constant 1 : index
    %c0_135 = arith.constant 0 : index
    %127 = vector.load %arg16[%c1_134, %c0_135] : memref<4x128xf32, #tpu.memory_space<vmem>>, vector<2x128xf32>
    tpu.vector_store %arg16[%c1_134, %c0_135], %126 {strides = array<i32>} : memref<4x128xf32, #tpu.memory_space<vmem>>, vector<2x128xf32>,
    %c0_136 = arith.constant 0 : index
    %c0_137 = arith.constant 0 : index
    %128 = tpu.strided_load %arg16[%c0_136, %c0_137] {strides = array<i32: 2, 1>} : memref<4x128xf32, #tpu.memory_space<vmem>>, vector<1x128xf32>
    %c0_138 = arith.constant 0 : index
    %c0_139 = arith.constant 0 : index
    %c0_140 = arith.constant 0 : index
    %129 = vector.load %arg10[%c0_138, %c0_139, %c0_140] : memref<4x128x128xf32, #tpu.memory_space<vmem>>, vector<1x128x128xf32>
    %130 = vector.shape_cast %129 : vector<1x128x128xf32> to vector<128x128xf32>
    %cst_141 = arith.constant dense<0.000000e+00> : vector<1x128xf32>
    %131 = tpu.matmul %128, %130, %cst_141 {dimension_numbers = #tpu.dot_dimension_numbers<[1], [0], [0], [1], [0, 0, 1, 1], [], []>} : vector<1x128xf32>, vector<128x128xf32>, vector<1x128xf32> -> vector<1x128xf32>
    %c1_142 = arith.constant 1 : index
    %c0_143 = arith.constant 0 : index
    %132 = tpu.strided_load %arg16[%c1_142, %c0_143] {strides = array<i32: 2, 1>} : memref<4x128xf32, #tpu.memory_space<vmem>>, vector<1x128xf32>
    %c1_144 = arith.constant 1 : index
    %c0_145 = arith.constant 0 : index
    %c0_146 = arith.constant 0 : index
    %133 = vector.load %arg10[%c1_144, %c0_145, %c0_146] : memref<4x128x128xf32, #tpu.memory_space<vmem>>, vector<1x128x128xf32>
    %134 = vector.shape_cast %133 : vector<1x128x128xf32> to vector<128x128xf32>
    %cst_147 = arith.constant dense<0.000000e+00> : vector<1x128xf32>
    %135 = tpu.matmul %132, %134, %cst_147 {dimension_numbers = #tpu.dot_dimension_numbers<[1], [0], [0], [1], [0, 0, 1, 1], [], []>} : vector<1x128xf32>, vector<128x128xf32>, vector<1x128xf32> -> vector<1x128xf32>
    %136 = arith.addf %131, %135 : vector<1x128xf32>
    %c2_148 = arith.constant 2 : index
    %c0_149 = arith.constant 0 : index
    %137 = tpu.strided_load %arg16[%c2_148, %c0_149] {strides = array<i32: 2, 1>} : memref<4x128xf32, #tpu.memory_space<vmem>>, vector<1x128xf32>
    %c2_150 = arith.constant 2 : index
    %c0_151 = arith.constant 0 : index
    %c0_152 = arith.constant 0 : index
    %138 = vector.load %arg10[%c2_150, %c0_151, %c0_152] : memref<4x128x128xf32, #tpu.memory_space<vmem>>, vector<1x128x128xf32>
    %139 = vector.shape_cast %138 : vector<1x128x128xf32> to vector<128x128xf32>
    %cst_153 = arith.constant dense<0.000000e+00> : vector<1x128xf32>
    %140 = tpu.matmul %137, %139, %cst_153 {dimension_numbers = #tpu.dot_dimension_numbers<[1], [0], [0], [1], [0, 0, 1, 1], [], []>} : vector<1x128xf32>, vector<128x128xf32>, vector<1x128xf32> -> vector<1x128xf32>
    %141 = arith.addf %136, %140 : vector<1x128xf32>
    %c3_154 = arith.constant 3 : index
    %c0_155 = arith.constant 0 : index
    %142 = tpu.strided_load %arg16[%c3_154, %c0_155] {strides = array<i32: 2, 1>} : memref<4x128xf32, #tpu.memory_space<vmem>>, vector<1x128xf32>
    %c3_156 = arith.constant 3 : index
    %c0_157 = arith.constant 0 : index
    %c0_158 = arith.constant 0 : index
    %143 = vector.load %arg10[%c3_156, %c0_157, %c0_158] : memref<4x128x128xf32, #tpu.memory_space<vmem>>, vector<1x128x128xf32>
    %144 = vector.shape_cast %143 : vector<1x128x128xf32> to vector<128x128xf32>
    %cst_159 = arith.constant dense<0.000000e+00> : vector<1x128xf32>
    %145 = tpu.matmul %142, %144, %cst_159 {dimension_numbers = #tpu.dot_dimension_numbers<[1], [0], [0], [1], [0, 0, 1, 1], [], []>} : vector<1x128xf32>, vector<128x128xf32>, vector<1x128xf32> -> vector<1x128xf32>
    %146 = arith.addf %141, %145 : vector<1x128xf32>
    %c0_160 = arith.constant 0 : index
    %c0_161 = arith.constant 0 : index
    %147 = vector.load %arg11[%c0_160, %c0_161] : memref<1x128xf32, #tpu.memory_space<vmem>>, vector<1x128xf32>
    %148 = arith.addf %146, %147 : vector<1x128xf32>
    %c0_162 = arith.constant 0 : index
    %c0_163 = arith.constant 0 : index
    %c0_164 = arith.constant 0 : index
    %149 = vector.load %arg12[%c0_162, %c0_163, %c0_164] : memref<1x1x128xf32, #tpu.memory_space<vmem>>, vector<1x1x128xf32>
    %150 = vector.shape_cast %149 : vector<1x1x128xf32> to vector<1x128xf32>
    %151 = vector.shape_cast %148 : vector<1x128xf32> to vector<1x1x128xf32>
    tpu.vector_store %arg12[%c0_162, %c0_163, %c0_164], %151 {strides = array<i32>} : memref<1x1x128xf32, #tpu.memory_space<vmem>>, vector<1x1x128xf32>,
    return
  }
  func.func @transform_0(%arg0: i32) -> (i32, i32, i32) {
    %c0_i32 = arith.constant 0 : i32
    %c0_i32_0 = arith.constant 0 : i32
    %c0_i32_1 = arith.constant 0 : i32
    return %arg0, %c0_i32, %c0_i32_0 : i32, i32, i32
  }
  func.func @transform_1(%arg0: i32) -> (i32, i32, i32) {
    %c0_i32 = arith.constant 0 : i32
    %c0_i32_0 = arith.constant 0 : i32
    %c0_i32_1 = arith.constant 0 : i32
    %c0_i32_2 = arith.constant 0 : i32
    return %c0_i32, %c0_i32_0, %c0_i32_1 : i32, i32, i32
  }
  func.func @transform_2(%arg0: i32) -> (i32, i32) {
    %c0_i32 = arith.constant 0 : i32
    %c0_i32_0 = arith.constant 0 : i32
    %c0_i32_1 = arith.constant 0 : i32
    return %c0_i32, %c0_i32_0 : i32, i32
  }
  func.func @transform_3(%arg0: i32) -> (i32, i32, i32) {
    %c0_i32 = arith.constant 0 : i32
    %c0_i32_0 = arith.constant 0 : i32
    %c0_i32_1 = arith.constant 0 : i32
    %c0_i32_2 = arith.constant 0 : i32
    return %c0_i32, %c0_i32_0, %c0_i32_1 : i32, i32, i32
  }
  func.func @transform_4(%arg0: i32) -> (i32, i32) {
    %c0_i32 = arith.constant 0 : i32
    %c0_i32_0 = arith.constant 0 : i32
    %c0_i32_1 = arith.constant 0 : i32
    return %c0_i32, %c0_i32_0 : i32, i32
  }
  func.func @transform_5(%arg0: i32) -> (i32, i32, i32) {
    %c0_i32 = arith.constant 0 : i32
    %c0_i32_0 = arith.constant 0 : i32
    %c0_i32_1 = arith.constant 0 : i32
    %c0_i32_2 = arith.constant 0 : i32
    return %c0_i32, %c0_i32_0, %c0_i32_1 : i32, i32, i32
  }
  func.func @transform_6(%arg0: i32) -> (i32, i32) {
    %c0_i32 = arith.constant 0 : i32
    %c0_i32_0 = arith.constant 0 : i32
    %c0_i32_1 = arith.constant 0 : i32
    return %c0_i32, %c0_i32_0 : i32, i32
  }
  func.func @transform_7(%arg0: i32) -> (i32, i32, i32) {
    %c0_i32 = arith.constant 0 : i32
    %c0_i32_0 = arith.constant 0 : i32
    %c0_i32_1 = arith.constant 0 : i32
    %c0_i32_2 = arith.constant 0 : i32
    return %c0_i32, %c0_i32_0, %c0_i32_1 : i32, i32, i32
  }
  func.func @transform_8(%arg0: i32) -> (i32, i32) {
    %c0_i32 = arith.constant 0 : i32
    %c0_i32_0 = arith.constant 0 : i32
    %c0_i32_1 = arith.constant 0 : i32
    return %c0_i32, %c0_i32_0 : i32, i32
  }
  func.func @transform_9(%arg0: i32) -> (i32, i32, i32) {
    %c0_i32 = arith.constant 0 : i32
    %c0_i32_0 = arith.constant 0 : i32
    %c0_i32_1 = arith.constant 0 : i32
    %c0_i32_2 = arith.constant 0 : i32
    return %c0_i32, %c0_i32_0, %c0_i32_1 : i32, i32, i32
  }
  func.func @transform_10(%arg0: i32) -> (i32, i32) {
    %c0_i32 = arith.constant 0 : i32
    %c0_i32_0 = arith.constant 0 : i32
    %c0_i32_1 = arith.constant 0 : i32
    return %c0_i32, %c0_i32_0 : i32, i32
  }
  func.func @transform_11(%arg0: i32) -> (i32, i32, i32) {
    %c0_i32 = arith.constant 0 : i32
    %c0_i32_0 = arith.constant 0 : i32
    %c0_i32_1 = arith.constant 0 : i32
    return %arg0, %c0_i32, %c0_i32_0 : i32, i32, i32
  }
}

</mosaic_0001>

<llo_original>
// kernel: tile.24
$region0: #{tile.24}
  #allocation0 [shape = 's32[1]{0}', space=sflag, size = 0x4, scoped, tag = 'scoped memory for tile.24']
  %s0 = inlined_call_operand.vmem [shape: f32[8], index: 0, kind: input, shape index: {}]
  %s1 = inlined_call_operand.vmem [shape: f32[16,8], index: 1, kind: output, shape index: {}]
  // Predicated region
  $region2: #{tile.24} parent=0 // pred_check
    _
  $region3: #{tile.24} parent=0 // pred_check_branch
    %3 = sbr.rel (0) target = $region5
  $region4: #{tile.24} parent=0 // pred_region
    _
  $region5: #{tile.24} parent=0 // pred_fallthru
    _
  %v4 = vld [vmem:[%s0] ss:$0 sm:$0xff]
  %5 = vst [vmem:[%s1] sm:$0xff] %v4
  %s6 = scalar_lea.vmem %s1, 8
  %7 = vst [vmem:[%s6] sm:$0xff] %v4

// kernel: tile.29
$region0: #{tile.29}
  #allocation0 [shape = 's32[1]{0}', space=sflag, size = 0x4, scoped, tag = 'scoped memory for tile.29']
  %s0 = inlined_call_operand.vmem [shape: f32[16], index: 0, kind: input, shape index: {}]
  %s1 = inlined_call_operand.vmem [shape: f32[8,16], index: 1, kind: output, shape index: {}]
  // Predicated region
  $region2: #{tile.29} parent=0 // pred_check
    _
  $region3: #{tile.29} parent=0 // pred_check_branch
    %3 = sbr.rel (0) target = $region5
  $region4: #{tile.29} parent=0 // pred_region
    _
  $region5: #{tile.29} parent=0 // pred_fallthru
    _
  %v4 = vld [vmem:[%s0] ss:$0 sm:$0xff]
  %5 = vst [vmem:[%s1] sm:$0xff] %v4

// kernel: tile.30
$region0: #{tile.30}
  %s0 = inlined_call_operand.vmem [shape: f32[8,16], index: 0, kind: input, shape index: {}]
  %s1 = inlined_call_operand.vmem [shape: f32[1,128], index: 1, kind: output, shape index: {}]
  $region1: #{tile.30} parent=0
    #allocation0 [shape = 'u8[4096]{0}', space=vmem, size = 0x1000, scoped, tag = 'scoped mem for output reshape']
    %v2 = vld [vmem:[%s0] sm:$0x1]
    %vm3 = vcmask 130048
    %4 = vst.msk [vmem:[#allocation0] sm:$0x1] %vm3, %v2
    %s5 = scalar_lea.vmem %s0, 7
    %v6 = vld [vmem:[%s5] sm:$0x1]
    %7 = vrot.lane.b32.xlu0 %v6, 112
    %v8 = vpop.permute.xlu0 %7
    %vm9 = vcmask 1048448
    %10 = vst.msk [vmem:[#allocation0] sm:$0x1] %vm9, %v8
    %s11 = scalar_lea.vmem %s0, 6
    %v12 = vld [vmem:[%s11] sm:$0x1]
    %13 = vrot.lane.b32.xlu0 %v12, 96
    %v14 = vpop.permute.xlu0 %13
    %vm15 = vcmask 917248
    %16 = vst.msk [vmem:[#allocation0] sm:$0x1] %vm15, %v14
    %s17 = scalar_lea.vmem %s0, 5
    %v18 = vld [vmem:[%s17] sm:$0x1]
    %19 = vrot.lane.b32.xlu0 %v18, 80
    %v20 = vpop.permute.xlu0 %19
    %vm21 = vcmask 786048
    %22 = vst.msk [vmem:[#allocation0] sm:$0x1] %vm21, %v20
    %s23 = scalar_lea.vmem %s0, 4
    %v24 = vld [vmem:[%s23] sm:$0x1]
    %25 = vrot.lane.b32.xlu0 %v24, 64
    %v26 = vpop.permute.xlu0 %25
    %vm27 = vcmask 654848
    %28 = vst.msk [vmem:[#allocation0] sm:$0x1] %vm27, %v26
    %s29 = scalar_lea.vmem %s0, 3
    %v30 = vld [vmem:[%s29] sm:$0x1]
    %31 = vrot.lane.b32.xlu0 %v30, 48
    %v32 = vpop.permute.xlu0 %31
    %vm33 = vcmask 523648
    %34 = vst.msk [vmem:[#allocation0] sm:$0x1] %vm33, %v32
    %s35 = scalar_lea.vmem %s0, 2
    %v36 = vld [vmem:[%s35] sm:$0x1]
    %37 = vrot.lane.b32.xlu0 %v36, 32
    %v38 = vpop.permute.xlu0 %37
    %vm39 = vcmask 392448
    %40 = vst.msk [vmem:[#allocation0] sm:$0x1] %vm39, %v38
    %s41 = scalar_lea.vmem %s0, 1
    %v42 = vld [vmem:[%s41] sm:$0x1]
    %43 = vrot.lane.b32.xlu0 %v42, 16
    %v44 = vpop.permute.xlu0 %43
    %vm45 = vcmask 261248
    %46 = vst.msk [vmem:[#allocation0] sm:$0x1] %vm45, %v44
    %s48 = ssub.s32 2, 1
    %v49 = vld [vmem:[#allocation0] sm:%s48]
    %s51 = ssub.s32 2, 1
    %52 = vst [vmem:[%s1] sm:%s51] %v49

// kernel: tile.25
$region0: #{tile.25}
  %s0 = inlined_call_operand.vmem [shape: f32[16,8], index: 0, kind: input, shape index: {}]
  %s1 = inlined_call_operand.vmem [shape: f32[1,128], index: 1, kind: output, shape index: {}]
  $region1: #{tile.25} parent=0
    #allocation0 [shape = 'u8[4096]{0}', space=vmem, size = 0x1000, scoped, tag = 'scoped mem for output reshape']
    %v2 = vld [vmem:[%s0] sm:$0x1]
    %vm3 = vcmask 64512
    %4 = vst.msk [vmem:[#allocation0] sm:$0x1] %vm3, %v2
    %s5 = scalar_lea.vmem %s0, 15
    %v6 = vld [vmem:[%s5] sm:$0x1]
    %7 = vrot.lane.b32.xlu0 %v6, 120
    %v8 = vpop.permute.xlu0 %7
    %vm9 = vcmask 1048512
    %10 = vst.msk [vmem:[#allocation0] sm:$0x1] %vm9, %v8
    %s11 = scalar_lea.vmem %s0, 14
    %v12 = vld [vmem:[%s11] sm:$0x1]
    %13 = vrot.lane.b32.xlu0 %v12, 112
    %v14 = vpop.permute.xlu0 %13
    %vm15 = vcmask 982912
    %16 = vst.msk [vmem:[#allocation0] sm:$0x1] %vm15, %v14
    %s17 = scalar_lea.vmem %s0, 13
    %v18 = vld [vmem:[%s17] sm:$0x1]
    %19 = vrot.lane.b32.xlu0 %v18, 104
    %v20 = vpop.permute.xlu0 %19
    %vm21 = vcmask 917312
    %22 = vst.msk [vmem:[#allocation0] sm:$0x1] %vm21, %v20
    %s23 = scalar_lea.vmem %s0, 12
    %v24 = vld [vmem:[%s23] sm:$0x1]
    %25 = vrot.lane.b32.xlu0 %v24, 96
    %v26 = vpop.permute.xlu0 %25
    %vm27 = vcmask 851712
    %28 = vst.msk [vmem:[#allocation0] sm:$0x1] %vm27, %v26
    %s29 = scalar_lea.vmem %s0, 11
    %v30 = vld [vmem:[%s29] sm:$0x1]
    %31 = vrot.lane.b32.xlu0 %v30, 88
    %v32 = vpop.permute.xlu0 %31
    %vm33 = vcmask 786112
    %34 = vst.msk [vmem:[#allocation0] sm:$0x1] %vm33, %v32
    %s35 = scalar_lea.vmem %s0, 10
    %v36 = vld [vmem:[%s35] sm:$0x1]
    %37 = vrot.lane.b32.xlu0 %v36, 80
    %v38 = vpop.permute.xlu0 %37
    %vm39 = vcmask 720512
    %40 = vst.msk [vmem:[#allocation0] sm:$0x1] %vm39, %v38
    %s41 = scalar_lea.vmem %s0, 9
    %v42 = vld [vmem:[%s41] sm:$0x1]
    %43 = vrot.lane.b32.xlu0 %v42, 72
    %v44 = vpop.permute.xlu0 %43
    %vm45 = vcmask 654912
    %46 = vst.msk [vmem:[#allocation0] sm:$0x1] %vm45, %v44
    %s47 = scalar_lea.vmem %s0, 8
    %v48 = vld [vmem:[%s47] sm:$0x1]
    %49 = vrot.lane.b32.xlu0 %v48, 64
    %v50 = vpop.permute.xlu0 %49
    %vm51 = vcmask 589312
    %52 = vst.msk [vmem:[#allocation0] sm:$0x1] %vm51, %v50
    %s53 = scalar_lea.vmem %s0, 7
    %v54 = vld [vmem:[%s53] sm:$0x1]
    %55 = vrot.lane.b32.xlu0 %v54, 56
    %v56 = vpop.permute.xlu0 %55
    %vm57 = vcmask 523712
    %58 = vst.msk [vmem:[#allocation0] sm:$0x1] %vm57, %v56
    %s59 = scalar_lea.vmem %s0, 6
    %v60 = vld [vmem:[%s59] sm:$0x1]
    %61 = vrot.lane.b32.xlu0 %v60, 48
    %v62 = vpop.permute.xlu0 %61
    %vm63 = vcmask 458112
    %64 = vst.msk [vmem:[#allocation0] sm:$0x1] %vm63, %v62
    %s65 = scalar_lea.vmem %s0, 5
    %v66 = vld [vmem:[%s65] sm:$0x1]
    %67 = vrot.lane.b32.xlu0 %v66, 40
    %v68 = vpop.permute.xlu0 %67
    %vm69 = vcmask 392512
    %70 = vst.msk [vmem:[#allocation0] sm:$0x1] %vm69, %v68
    %s71 = scalar_lea.vmem %s0, 4
    %v72 = vld [vmem:[%s71] sm:$0x1]
    %73 = vrot.lane.b32.xlu0 %v72, 32
    %v74 = vpop.permute.xlu0 %73
    %vm75 = vcmask 326912
    %76 = vst.msk [vmem:[#allocation0] sm:$0x1] %vm75, %v74
    %s77 = scalar_lea.vmem %s0, 3
    %v78 = vld [vmem:[%s77] sm:$0x1]
    %79 = vrot.lane.b32.xlu0 %v78, 24
    %v80 = vpop.permute.xlu0 %79
    %vm81 = vcmask 261312
    %82 = vst.msk [vmem:[#allocation0] sm:$0x1] %vm81, %v80
    %s83 = scalar_lea.vmem %s0, 2
    %v84 = vld [vmem:[%s83] sm:$0x1]
    %85 = vrot.lane.b32.xlu0 %v84, 16
    %v86 = vpop.permute.xlu0 %85
    %vm87 = vcmask 195712
    %88 = vst.msk [vmem:[#allocation0] sm:$0x1] %vm87, %v86
    %s89 = scalar_lea.vmem %s0, 1
    %v90 = vld [vmem:[%s89] sm:$0x1]
    %91 = vrot.lane.b32.xlu0 %v90, 8
    %v92 = vpop.permute.xlu0 %91
    %vm93 = vcmask 130112
    %94 = vst.msk [vmem:[#allocation0] sm:$0x1] %vm93, %v92
    %s96 = ssub.s32 2, 1
    %v97 = vld [vmem:[#allocation0] sm:%s96]
    %s99 = ssub.s32 2, 1
    %100 = vst [vmem:[%s1] sm:%s99] %v97

// kernel: tile.34
$region0: #{tile.34}
  #allocation0 [shape = 's32[1]{0}', space=sflag, size = 0x4, scoped, tag = 'scoped memory for tile.34']
  %s0 = inlined_call_operand.vmem [shape: f32[32], index: 0, kind: input, shape index: {}]
  %s1 = inlined_call_operand.vmem [shape: f32[4,32], index: 1, kind: output, shape index: {}]
  // Predicated region
  $region2: #{tile.34} parent=0 // pred_check
    _
  $region3: #{tile.34} parent=0 // pred_check_branch
    %3 = sbr.rel (0) target = $region5
  $region4: #{tile.34} parent=0 // pred_region
    _
  $region5: #{tile.34} parent=0 // pred_fallthru
    _
  %v4 = vld [vmem:[%s0] ss:$0 sm:$0xff]
  %5 = vst [vmem:[%s1] sm:$0xf] %v4

// kernel: tile.35
$region0: #{tile.35}
  %s0 = inlined_call_operand.vmem [shape: f32[4,32], index: 0, kind: input, shape index: {}]
  %s1 = inlined_call_operand.vmem [shape: f32[1,128], index: 1, kind: output, shape index: {}]
  $region1: #{tile.35} parent=0
    #allocation0 [shape = 'u8[4096]{0}', space=vmem, size = 0x1000, scoped, tag = 'scoped mem for output reshape']
    #allocation1 [shape = 'u8[4096]{0}', space=vmem, size = 0x1000, scoped, tag = 'scoped mem for input reshape']
    %s3 = ssub.s32 16, 1
    %v4 = vld [vmem:[%s0] sm:%s3]
    %5 = vst [vmem:[#allocation1] sm:%s3] %v4
    %v6 = vld [vmem:[#allocation1] sm:$0x1]
    %vm7 = vcmask 261120
    %8 = vst.msk [vmem:[#allocation0] sm:$0x1] %vm7, %v6
    %s9 = scalar_lea.vmem [#allocation1], 3
    %v10 = vld [vmem:[%s9] sm:$0x1]
    %11 = vrot.lane.b32.xlu0 %v10, 96
    %v12 = vpop.permute.xlu0 %11
    %vm13 = vcmask 1048320
    %14 = vst.msk [vmem:[#allocation0] sm:$0x1] %vm13, %v12
    %s15 = scalar_lea.vmem [#allocation1], 2
    %v16 = vld [vmem:[%s15] sm:$0x1]
    %17 = vrot.lane.b32.xlu0 %v16, 64
    %v18 = vpop.permute.xlu0 %17
    %vm19 = vcmask 785920
    %20 = vst.msk [vmem:[#allocation0] sm:$0x1] %vm19, %v18
    %s21 = scalar_lea.vmem [#allocation1], 1
    %v22 = vld [vmem:[%s21] sm:$0x1]
    %23 = vrot.lane.b32.xlu0 %v22, 32
    %v24 = vpop.permute.xlu0 %23
    %vm25 = vcmask 523520
    %26 = vst.msk [vmem:[#allocation0] sm:$0x1] %vm25, %v24
    %s28 = ssub.s32 2, 1
    %v29 = vld [vmem:[#allocation0] sm:%s28]
    %s31 = ssub.s32 2, 1
    %32 = vst [vmem:[%s1] sm:%s31] %v29

// kernel: tile.39
$region0: #{tile.39}
  #allocation0 [shape = 's32[1]{0}', space=sflag, size = 0x4, scoped, tag = 'scoped memory for tile.39']
  %s0 = inlined_call_operand.vmem [shape: f32[64], index: 0, kind: input, shape index: {}]
  %s1 = inlined_call_operand.vmem [shape: f32[2,64], index: 1, kind: output, shape index: {}]
  // Predicated region
  $region2: #{tile.39} parent=0 // pred_check
    _
  $region3: #{tile.39} parent=0 // pred_check_branch
    %3 = sbr.rel (0) target = $region5
  $region4: #{tile.39} parent=0 // pred_region
    _
  $region5: #{tile.39} parent=0 // pred_fallthru
    _
  %v4 = vld [vmem:[%s0] ss:$0 sm:$0xff]
  %5 = vst [vmem:[%s1] sm:$0x3] %v4

// kernel: tile.40
$region0: #{tile.40}
  %s0 = inlined_call_operand.vmem [shape: f32[2,64], index: 0, kind: input, shape index: {}]
  %s1 = inlined_call_operand.vmem [shape: f32[1,128], index: 1, kind: output, shape index: {}]
  $region1: #{tile.40} parent=0
    #allocation0 [shape = 'u8[4096]{0}', space=vmem, size = 0x1000, scoped, tag = 'scoped mem for output reshape']
    #allocation1 [shape = 'u8[4096]{0}', space=vmem, size = 0x1000, scoped, tag = 'scoped mem for input reshape']
    %s3 = ssub.s32 4, 1
    %v4 = vld [vmem:[%s0] sm:%s3]
    %5 = vst [vmem:[#allocation1] sm:%s3] %v4
    %v6 = vld [vmem:[#allocation1] sm:$0x1]
    %vm7 = vcmask 523264
    %8 = vst.msk [vmem:[#allocation0] sm:$0x1] %vm7, %v6
    %s9 = scalar_lea.vmem [#allocation1], 1
    %v10 = vld [vmem:[%s9] sm:$0x1]
    %11 = vrot.lane.b32.xlu0 %v10, 64
    %v12 = vpop.permute.xlu0 %11
    %vm13 = vcmask 1048064
    %14 = vst.msk [vmem:[#allocation0] sm:$0x1] %vm13, %v12
    %s16 = ssub.s32 2, 1
    %v17 = vld [vmem:[#allocation0] sm:%s16]
    %s19 = ssub.s32 2, 1
    %20 = vst [vmem:[%s1] sm:%s19] %v17

// kernel: model_discriminate_forward.1
$region0: #{model_discriminate_forward.1}
  #allocation0 [shape = 'u32[]', space=smem, size = 0x4, offset = 0x4, fixed_abs, tag = 'smem constant byte address 0x4 - core index']
  #allocation1 [shape = 'u32[72,128]{1,0:T(1,128)}', space=vmem, size = 0x9000, scoped, tag = 'internal scratch']
  #allocation2 [shape = 'f32[18,128]{1,0:T(8,128)}', space=vmem, size = 0x3000, scoped, tag = 'scratch operand']
  #allocation3 [shape = 'f32[10,128]{1,0:T(8,128)}', space=vmem, size = 0x2000, scoped, tag = 'scratch operand']
  #allocation4 [shape = 'f32[6,128]{1,0:T(8,128)}', space=vmem, size = 0x1000, scoped, tag = 'scratch operand']
  #allocation5 [shape = 'f32[4,128]{1,0:T(4,128)}', space=vmem, size = 0x800, scoped, tag = 'scratch operand']
  %s0 = inlined_call_operand.vmem [shape: f32[2,34,128], index: 0, kind: input, shape index: {}]
  %s1 = inlined_call_operand.vmem [shape: f32[4,128,128], index: 1, kind: input, shape index: {}]
  %s2 = inlined_call_operand.vmem [shape: f32[1,128], index: 2, kind: input, shape index: {}]
  %s3 = inlined_call_operand.vmem [shape: f32[4,128,128], index: 3, kind: input, shape index: {}]
  %s4 = inlined_call_operand.vmem [shape: f32[1,128], index: 4, kind: input, shape index: {}]
  %s5 = inlined_call_operand.vmem [shape: f32[4,128,128], index: 5, kind: input, shape index: {}]
  %s6 = inlined_call_operand.vmem [shape: f32[1,128], index: 6, kind: input, shape index: {}]
  %s7 = inlined_call_operand.vmem [shape: f32[4,128,128], index: 7, kind: input, shape index: {}]
  %s8 = inlined_call_operand.vmem [shape: f32[1,128], index: 8, kind: input, shape index: {}]
  %s9 = inlined_call_operand.vmem [shape: f32[4,128,128], index: 9, kind: input, shape index: {}]
  %s10 = inlined_call_operand.vmem [shape: f32[1,128], index: 10, kind: input, shape index: {}]
  %s11 = inlined_call_operand.vmem [shape: f32[2,1,128], index: 11, kind: output, shape index: {}]
  %s12 = sld [smem:[#allocation0]]
  $region77: #{model_discriminate_forward.1} parent=0
    _
  %s14 = ssub.s32 1, %s12
  %s15 = scalar_select 0, %s14, %s12
  loop: start=0, step=1, limit=4
  $region2: #{model_discriminate_forward.1} parent=0 // loop_pre_header
    _
  $region3: #{model_discriminate_forward.1} parent=0 // loop_header
    %s17 = sphi 0, %s21
    %p18 = scmp.ge.s32.totalorder %s17, 4
    %s27 = sphi 0, %s29
    %s30 = sphi 0, %s27
    %s31 = sphi 0, %s30
    %s47 = sphi 0, %s31
    %s51 = sphi 0, %s51
    %s53 = sphi 0, %s51
    %s54 = sphi 0, %s53
    %s68 = sphi 0, %s54
    %s72 = sphi 0, %s72
    %s74 = sphi 0, %s72
    %s75 = sphi 0, %s74
    %s89 = sphi 0, %s75
    %s93 = sphi 0, %s93
    %s95 = sphi 0, %s93
    %s96 = sphi 0, %s95
    %s110 = sphi 0, %s96
    %s114 = sphi 0, %s114
    %s116 = sphi 0, %s114
    %s117 = sphi 0, %s116
    %s131 = sphi 0, %s117
    %s135 = sphi 0, %s135
    %s137 = sphi 0, %s135
    %s138 = sphi 0, %s137
    %s152 = sphi 0, %s138
    %s156 = sphi 0, %s156
    %s158 = sphi 0, %s156
    %s159 = sphi 0, %s158
    %s173 = sphi 0, %s159
    %s177 = sphi 0, %s177
    %s179 = sphi 0, %s177
    %s180 = sphi 0, %s179
    %s194 = sphi 0, %s180
    %s198 = sphi 0, %s198
    %s200 = sphi 0, %s198
    %s201 = sphi 0, %s200
    %s215 = sphi 0, %s201
    %s219 = sphi 0, %s219
    %s221 = sphi 0, %s219
    %s222 = sphi 0, %s221
    %s236 = sphi 0, %s222
    %s240 = sphi 0, %s240
    %s242 = sphi 0, %s240
    %s243 = sphi 0, %s242
    %s257 = sphi 0, %s243
    %s263 = sphi 0, %s265
    %s266 = sphi 0, %s263
    %s267 = sphi 0, %s266
    %s283 = sphi 0, %s267
  $region4: #{model_discriminate_forward.1} parent=0 // loop_header_branch
    %20 = sbr.rel (%p18) target = $region8
  $region5: #{model_discriminate_forward.1} parent=0 // loop_body
    %s22 = ssub.s32 %s17, 1
    %s23 = ssub.s32 %s17, 2
    %s24 = sadd.s32 %s17, 1
    %s25 = ssub.s32 %s17, %s24
    %p26 = scmp.eq.s32.totalorder %s25, 0
    %s28 = sadd.s32 %s27, 1
    %s29 = scalar_select %p26, %s27, %s28
    %p32 = pneg %p26
    %p33 = scmp.eq.s32.totalorder %s17, 1
    %p34 = por %p32, %p33
    %p35 = scmp.ne.s32.totalorder %s27, %s30
    %p36 = scmp.eq.s32.totalorder %s17, 0
    %p37 = por %p35, %p36
    %p38 = scmp.ne.s32.totalorder %s27, %s30
    %p39 = scmp.eq.s32.totalorder %s22, 1
    %p40 = por %p38, %p39
    %p41 = scmp.ne.s32.totalorder %s30, %s31
    %p42 = scmp.eq.s32.totalorder %s22, 0
    %p43 = por %p41, %p42
    %p44 = scmp.ne.s32.totalorder %s30, %s31
    %p45 = scmp.eq.s32.totalorder %s23, 1
    %p46 = por %p44, %p45
    %p48 = scmp.ne.s32.totalorder %s31, %s47
    %p49 = scmp.eq.s32.totalorder %s23, 0
    %p50 = por %p48, %p49
    %s52 = sadd.s32 %s51, 1
    %p55 = scmp.eq.s32.totalorder %s17, 1
    %p56 = scmp.ne.s32.totalorder %s51, %s53
    %p57 = scmp.eq.s32.totalorder %s17, 0
    %p58 = por %p56, %p57
    %p59 = scmp.ne.s32.totalorder %s51, %s53
    %p60 = scmp.eq.s32.totalorder %s22, 1
    %p61 = por %p59, %p60
    %p62 = scmp.ne.s32.totalorder %s53, %s54
    %p63 = scmp.eq.s32.totalorder %s22, 0
    %p64 = por %p62, %p63
    %p65 = scmp.ne.s32.totalorder %s53, %s54
    %p66 = scmp.eq.s32.totalorder %s23, 1
    %p67 = por %p65, %p66
    %p69 = scmp.ne.s32.totalorder %s54, %s68
    %p70 = scmp.eq.s32.totalorder %s23, 0
    %p71 = por %p69, %p70
    %s73 = sadd.s32 %s72, 1
    %p76 = scmp.eq.s32.totalorder %s17, 1
    %p77 = scmp.ne.s32.totalorder %s72, %s74
    %p78 = scmp.eq.s32.totalorder %s17, 0
    %p79 = por %p77, %p78
    %p80 = scmp.ne.s32.totalorder %s72, %s74
    %p81 = scmp.eq.s32.totalorder %s22, 1
    %p82 = por %p80, %p81
    %p83 = scmp.ne.s32.totalorder %s74, %s75
    %p84 = scmp.eq.s32.totalorder %s22, 0
    %p85 = por %p83, %p84
    %p86 = scmp.ne.s32.totalorder %s74, %s75
    %p87 = scmp.eq.s32.totalorder %s23, 1
    %p88 = por %p86, %p87
    %p90 = scmp.ne.s32.totalorder %s75, %s89
    %p91 = scmp.eq.s32.totalorder %s23, 0
    %p92 = por %p90, %p91
    %s94 = sadd.s32 %s93, 1
    %p97 = scmp.eq.s32.totalorder %s17, 1
    %p98 = scmp.ne.s32.totalorder %s93, %s95
    %p99 = scmp.eq.s32.totalorder %s17, 0
    %p100 = por %p98, %p99
    %p101 = scmp.ne.s32.totalorder %s93, %s95
    %p102 = scmp.eq.s32.totalorder %s22, 1
    %p103 = por %p101, %p102
    %p104 = scmp.ne.s32.totalorder %s95, %s96
    %p105 = scmp.eq.s32.totalorder %s22, 0
    %p106 = por %p104, %p105
    %p107 = scmp.ne.s32.totalorder %s95, %s96
    %p108 = scmp.eq.s32.totalorder %s23, 1
    %p109 = por %p107, %p108
    %p111 = scmp.ne.s32.totalorder %s96, %s110
    %p112 = scmp.eq.s32.totalorder %s23, 0
    %p113 = por %p111, %p112
    %s115 = sadd.s32 %s114, 1
    %p118 = scmp.eq.s32.totalorder %s17, 1
    %p119 = scmp.ne.s32.totalorder %s114, %s116
    %p120 = scmp.eq.s32.totalorder %s17, 0
    %p121 = por %p119, %p120
    %p122 = scmp.ne.s32.totalorder %s114, %s116
    %p123 = scmp.eq.s32.totalorder %s22, 1
    %p124 = por %p122, %p123
    %p125 = scmp.ne.s32.totalorder %s116, %s117
    %p126 = scmp.eq.s32.totalorder %s22, 0
    %p127 = por %p125, %p126
    %p128 = scmp.ne.s32.totalorder %s116, %s117
    %p129 = scmp.eq.s32.totalorder %s23, 1
    %p130 = por %p128, %p129
    %p132 = scmp.ne.s32.totalorder %s117, %s131
    %p133 = scmp.eq.s32.totalorder %s23, 0
    %p134 = por %p132, %p133
    %s136 = sadd.s32 %s135, 1
    %p139 = scmp.eq.s32.totalorder %s17, 1
    %p140 = scmp.ne.s32.totalorder %s135, %s137
    %p141 = scmp.eq.s32.totalorder %s17, 0
    %p142 = por %p140, %p141
    %p143 = scmp.ne.s32.totalorder %s135, %s137
    %p144 = scmp.eq.s32.totalorder %s22, 1
    %p145 = por %p143, %p144
    %p146 = scmp.ne.s32.totalorder %s137, %s138
    %p147 = scmp.eq.s32.totalorder %s22, 0
    %p148 = por %p146, %p147
    %p149 = scmp.ne.s32.totalorder %s137, %s138
    %p150 = scmp.eq.s32.totalorder %s23, 1
    %p151 = por %p149, %p150
    %p153 = scmp.ne.s32.totalorder %s138, %s152
    %p154 = scmp.eq.s32.totalorder %s23, 0
    %p155 = por %p153, %p154
    %s157 = sadd.s32 %s156, 1
    %p160 = scmp.eq.s32.totalorder %s17, 1
    %p161 = scmp.ne.s32.totalorder %s156, %s158
    %p162 = scmp.eq.s32.totalorder %s17, 0
    %p163 = por %p161, %p162
    %p164 = scmp.ne.s32.totalorder %s156, %s158
    %p165 = scmp.eq.s32.totalorder %s22, 1
    %p166 = por %p164, %p165
    %p167 = scmp.ne.s32.totalorder %s158, %s159
    %p168 = scmp.eq.s32.totalorder %s22, 0
    %p169 = por %p167, %p168
    %p170 = scmp.ne.s32.totalorder %s158, %s159
    %p171 = scmp.eq.s32.totalorder %s23, 1
    %p172 = por %p170, %p171
    %p174 = scmp.ne.s32.totalorder %s159, %s173
    %p175 = scmp.eq.s32.totalorder %s23, 0
    %p176 = por %p174, %p175
    %s178 = sadd.s32 %s177, 1
    %p181 = scmp.eq.s32.totalorder %s17, 1
    %p182 = scmp.ne.s32.totalorder %s177, %s179
    %p183 = scmp.eq.s32.totalorder %s17, 0
    %p184 = por %p182, %p183
    %p185 = scmp.ne.s32.totalorder %s177, %s179
    %p186 = scmp.eq.s32.totalorder %s22, 1
    %p187 = por %p185, %p186
    %p188 = scmp.ne.s32.totalorder %s179, %s180
    %p189 = scmp.eq.s32.totalorder %s22, 0
    %p190 = por %p188, %p189
    %p191 = scmp.ne.s32.totalorder %s179, %s180
    %p192 = scmp.eq.s32.totalorder %s23, 1
    %p193 = por %p191, %p192
    %p195 = scmp.ne.s32.totalorder %s180, %s194
    %p196 = scmp.eq.s32.totalorder %s23, 0
    %p197 = por %p195, %p196
    %s199 = sadd.s32 %s198, 1
    %p202 = scmp.eq.s32.totalorder %s17, 1
    %p203 = scmp.ne.s32.totalorder %s198, %s200
    %p204 = scmp.eq.s32.totalorder %s17, 0
    %p205 = por %p203, %p204
    %p206 = scmp.ne.s32.totalorder %s198, %s200
    %p207 = scmp.eq.s32.totalorder %s22, 1
    %p208 = por %p206, %p207
    %p209 = scmp.ne.s32.totalorder %s200, %s201
    %p210 = scmp.eq.s32.totalorder %s22, 0
    %p211 = por %p209, %p210
    %p212 = scmp.ne.s32.totalorder %s200, %s201
    %p213 = scmp.eq.s32.totalorder %s23, 1
    %p214 = por %p212, %p213
    %p216 = scmp.ne.s32.totalorder %s201, %s215
    %p217 = scmp.eq.s32.totalorder %s23, 0
    %p218 = por %p216, %p217
    %s220 = sadd.s32 %s219, 1
    %p223 = scmp.eq.s32.totalorder %s17, 1
    %p224 = scmp.ne.s32.totalorder %s219, %s221
    %p225 = scmp.eq.s32.totalorder %s17, 0
    %p226 = por %p224, %p225
    %p227 = scmp.ne.s32.totalorder %s219, %s221
    %p228 = scmp.eq.s32.totalorder %s22, 1
    %p229 = por %p227, %p228
    %p230 = scmp.ne.s32.totalorder %s221, %s222
    %p231 = scmp.eq.s32.totalorder %s22, 0
    %p232 = por %p230, %p231
    %p233 = scmp.ne.s32.totalorder %s221, %s222
    %p234 = scmp.eq.s32.totalorder %s23, 1
    %p235 = por %p233, %p234
    %p237 = scmp.ne.s32.totalorder %s222, %s236
    %p238 = scmp.eq.s32.totalorder %s23, 0
    %p239 = por %p237, %p238
    %s241 = sadd.s32 %s240, 1
    %p244 = scmp.eq.s32.totalorder %s17, 1
    %p245 = scmp.ne.s32.totalorder %s240, %s242
    %p246 = scmp.eq.s32.totalorder %s17, 0
    %p247 = por %p245, %p246
    %p248 = scmp.ne.s32.totalorder %s240, %s242
    %p249 = scmp.eq.s32.totalorder %s22, 1
    %p250 = por %p248, %p249
    %p251 = scmp.ne.s32.totalorder %s242, %s243
    %p252 = scmp.eq.s32.totalorder %s22, 0
    %p253 = por %p251, %p252
    %p254 = scmp.ne.s32.totalorder %s242, %s243
    %p255 = scmp.eq.s32.totalorder %s23, 1
    %p256 = por %p254, %p255
    %p258 = scmp.ne.s32.totalorder %s243, %s257
    %p259 = scmp.eq.s32.totalorder %s23, 0
    %p260 = por %p258, %p259
    %s261 = ssub.s32 %s17, %s24
    %p262 = scmp.eq.s32.totalorder %s261, 0
    %s264 = sadd.s32 %s263, 1
    %s265 = scalar_select %p262, %s263, %s264
    %p268 = pneg %p262
    %p269 = scmp.eq.s32.totalorder %s17, 1
    %p270 = por %p268, %p269
    %p271 = scmp.ne.s32.totalorder %s263, %s266
    %p272 = scmp.eq.s32.totalorder %s17, 0
    %p273 = por %p271, %p272
    %p274 = scmp.ne.s32.totalorder %s263, %s266
    %p275 = scmp.eq.s32.totalorder %s22, 1
    %p276 = por %p274, %p275
    %p277 = scmp.ne.s32.totalorder %s266, %s267
    %p278 = scmp.eq.s32.totalorder %s22, 0
    %p279 = por %p277, %p278
    %p280 = scmp.ne.s32.totalorder %s266, %s267
    %p281 = scmp.eq.s32.totalorder %s23, 1
    %p282 = por %p280, %p281
    %p284 = scmp.ne.s32.totalorder %s267, %s283
    %p285 = scmp.eq.s32.totalorder %s23, 0
    %p286 = por %p284, %p285
    %p287 = scmp.le.s32.totalorder 1, %s17
    %p288 = scmp.lt.s32.totalorder %s17, 3
    %p289 = pnand %p287, %p288
    %p290 = pneg %p289
    // Predicated region
    $region9: #{model_discriminate_forward.1} parent=5 // pred_check
      _
    $region10: #{model_discriminate_forward.1} parent=5 // pred_check_branch
      %292 = sbr.rel (%p289) target = $region12
    $region11: #{model_discriminate_forward.1} parent=5 // pred_region
      %s293 = ssub.s32 %s17, 1
      // Predicated region
      $region13: #{model_discriminate_forward.1} parent=11 // pred_check
        %p294 = pneg %p64
      $region14: #{model_discriminate_forward.1} parent=11 // pred_check_branch
        %296 = sbr.rel (%p294) target = $region16
      $region15: #{model_discriminate_forward.1} parent=11 // pred_region
        _
      $region16: #{model_discriminate_forward.1} parent=11 // pred_fallthru
        _
      // Predicated region
      $region17: #{model_discriminate_forward.1} parent=11 // pred_check
        %p297 = pneg %p85
      $region18: #{model_discriminate_forward.1} parent=11 // pred_check_branch
        %299 = sbr.rel (%p297) target = $region20
      $region19: #{model_discriminate_forward.1} parent=11 // pred_region
        _
      $region20: #{model_discriminate_forward.1} parent=11 // pred_fallthru
        _
      // Predicated region
      $region21: #{model_discriminate_forward.1} parent=11 // pred_check
        %p300 = pneg %p106
      $region22: #{model_discriminate_forward.1} parent=11 // pred_check_branch
        %302 = sbr.rel (%p300) target = $region24
      $region23: #{model_discriminate_forward.1} parent=11 // pred_region
        _
      $region24: #{model_discriminate_forward.1} parent=11 // pred_fallthru
        _
      // Predicated region
      $region25: #{model_discriminate_forward.1} parent=11 // pred_check
        %p303 = pneg %p127
      $region26: #{model_discriminate_forward.1} parent=11 // pred_check_branch
        %305 = sbr.rel (%p303) target = $region28
      $region27: #{model_discriminate_forward.1} parent=11 // pred_region
        _
      $region28: #{model_discriminate_forward.1} parent=11 // pred_fallthru
        _
      // Predicated region
      $region29: #{model_discriminate_forward.1} parent=11 // pred_check
        %p306 = pneg %p148
      $region30: #{model_discriminate_forward.1} parent=11 // pred_check_branch
        %308 = sbr.rel (%p306) target = $region32
      $region31: #{model_discriminate_forward.1} parent=11 // pred_region
        _
      $region32: #{model_discriminate_forward.1} parent=11 // pred_fallthru
        _
      // Predicated region
      $region33: #{model_discriminate_forward.1} parent=11 // pred_check
        %p309 = pneg %p169
      $region34: #{model_discriminate_forward.1} parent=11 // pred_check_branch
        %311 = sbr.rel (%p309) target = $region36
      $region35: #{model_discriminate_forward.1} parent=11 // pred_region
        _
      $region36: #{model_discriminate_forward.1} parent=11 // pred_fallthru
        _
      // Predicated region
      $region37: #{model_discriminate_forward.1} parent=11 // pred_check
        %p312 = pneg %p190
      $region38: #{model_discriminate_forward.1} parent=11 // pred_check_branch
        %314 = sbr.rel (%p312) target = $region40
      $region39: #{model_discriminate_forward.1} parent=11 // pred_region
        _
      $region40: #{model_discriminate_forward.1} parent=11 // pred_fallthru
        _
      // Predicated region
      $region41: #{model_discriminate_forward.1} parent=11 // pred_check
        %p315 = pneg %p211
      $region42: #{model_discriminate_forward.1} parent=11 // pred_check_branch
        %317 = sbr.rel (%p315) target = $region44
      $region43: #{model_discriminate_forward.1} parent=11 // pred_region
        _
      $region44: #{model_discriminate_forward.1} parent=11 // pred_fallthru
        _
      // Predicated region
      $region45: #{model_discriminate_forward.1} parent=11 // pred_check
        %p318 = pneg %p232
      $region46: #{model_discriminate_forward.1} parent=11 // pred_check_branch
        %320 = sbr.rel (%p318) target = $region48
      $region47: #{model_discriminate_forward.1} parent=11 // pred_region
        _
      $region48: #{model_discriminate_forward.1} parent=11 // pred_fallthru
        _
      // Predicated region
      $region49: #{model_discriminate_forward.1} parent=11 // pred_check
        %p321 = pneg %p253
      $region50: #{model_discriminate_forward.1} parent=11 // pred_check_branch
        %323 = sbr.rel (%p321) target = $region52
      $region51: #{model_discriminate_forward.1} parent=11 // pred_region
        _
      $region52: #{model_discriminate_forward.1} parent=11 // pred_fallthru
        _
    $region12: #{model_discriminate_forward.1} parent=5 // pred_fallthru
      _
    %p324 = scmp.lt.s32.totalorder %s17, 2
    // Predicated region
    $region53: #{model_discriminate_forward.1} parent=5 // pred_check
      %p325 = pneg %p324
    $region54: #{model_discriminate_forward.1} parent=5 // pred_check_branch
      %327 = sbr.rel (%p325) target = $region56
    $region55: #{model_discriminate_forward.1} parent=5 // pred_region
      // Predicated region
      $region57: #{model_discriminate_forward.1} parent=55 // pred_check
        %p328 = pneg %p37
      $region58: #{model_discriminate_forward.1} parent=55 // pred_check_branch
        %330 = sbr.rel (%p328) target = $region60
      $region59: #{model_discriminate_forward.1} parent=55 // pred_region
        %p331 = scmp.lt.s32.totalorder %s17, 1
        %s332 = scalar_select %p331, %s17, 1
        %s333 = smul.addr %s332, 5
        %s334 = smul.addr %s333, 8
        %s335 = scalar_lea.vmem %s0, %s334
      $region60: #{model_discriminate_forward.1} parent=55 // pred_fallthru
        _
    $region56: #{model_discriminate_forward.1} parent=5 // pred_fallthru
      _
    %p336 = scmp.le.s32.totalorder 1, %s17
    %p337 = scmp.lt.s32.totalorder %s17, 3
    %p338 = pnand %p336, %p337
    %p339 = pneg %p338
    // Predicated region
    $region61: #{model_discriminate_forward.1} parent=5 // pred_check
      _
    $region62: #{model_discriminate_forward.1} parent=5 // pred_check_branch
      %341 = sbr.rel (%p338) target = $region64
    $region63: #{model_discriminate_forward.1} parent=5 // pred_region
      %s342 = ssub.s32 %s17, 1
      %p343 = scmp.lt.s32.totalorder %s22, 1
      %s344 = scalar_select %p343, %s22, 1
      %s345 = smul.addr %s344, 5
      %s346 = smul.addr %s345, 8
      %s347 = scalar_lea.vmem %s0, %s346
      %p348 = pneg %p43
      %p349 = pneg %p40
      %p350 = pneg %p64
      %p351 = pneg %p61
      %p352 = pneg %p85
      %p353 = pneg %p82
      %p354 = pneg %p106
      %p355 = pneg %p103
      %p356 = pneg %p127
      %p357 = pneg %p124
      %p358 = pneg %p148
      %p359 = pneg %p145
      %p360 = pneg %p169
      %p361 = pneg %p166
      %p362 = pneg %p190
      %p363 = pneg %p187
      %p364 = pneg %p211
      %p365 = pneg %p208
      %p366 = pneg %p232
      %p367 = pneg %p229
      %p368 = pneg %p253
      %p369 = pneg %p250
      %p370 = pneg %p279
      %p371 = pneg %p276
      %p372 = scmp.lt.s32.totalorder %s22, 1
      %s373 = scalar_select %p372, %s22, 1
      %s374 = scalar_lea.vmem %s11, %s373
      %p375 = scmp.lt.s32.totalorder %s22, 1
      %s376 = scalar_select %p375, %s22, 1
      %s377 = smul.addr %s376, 5
      %s378 = smul.addr %s377, 8
      %s379 = scalar_lea.vmem %s0, %s378
      %p380 = scmp.lt.s32.totalorder %s22, 1
      %s381 = scalar_select %p380, %s22, 1
      %s382 = scalar_lea.vmem %s11, %s381
      %383 = vst [vmem:[#allocation2] sm:$0x1] 0.0
      %384 = vst [vmem:[#allocation2 + $0x11] sm:$0x1] 0.0
      %385 = vst [vmem:[#allocation3] sm:$0x1] 0.0
      %386 = vst [vmem:[#allocation3 + $0x9] sm:$0x1] 0.0
      %387 = vst [vmem:[#allocation4] sm:$0x1] 0.0
      %388 = vst [vmem:[#allocation4 + $0x5] sm:$0x1] 0.0
      %389 = vst [vmem:[#allocation5] sm:$0x1] 0.0
      %390 = vst [vmem:[#allocation5 + $0x3] sm:$0x1] 0.0
      %v391 = vld [vmem:[%s379] ss:$2 sm:$0xff]
      %s392 = scalar_lea.vmem %s379, 16
      %v393 = vld [vmem:[%s392] ss:$2 sm:$0xff]
      %v394 = vld [vmem:[%s1] sm:$0xff]
      %v395 = vld [vmem:[%s1 + $0x8] sm:$0xff]
      %v396 = vld [vmem:[%s1 + $0x10] sm:$0xff]
      %v397 = vld [vmem:[%s1 + $0x18] sm:$0xff]
      %v398 = vld [vmem:[%s1 + $0x20] sm:$0xff]
      %v399 = vld [vmem:[%s1 + $0x28] sm:$0xff]
      %v400 = vld [vmem:[%s1 + $0x30] sm:$0xff]
      %v401 = vld [vmem:[%s1 + $0x38] sm:$0xff]
      %v402 = vld [vmem:[%s1 + $0x40] sm:$0xff]
      %v403 = vld [vmem:[%s1 + $0x48] sm:$0xff]
      %v404 = vld [vmem:[%s1 + $0x50] sm:$0xff]
      %v405 = vld [vmem:[%s1 + $0x58] sm:$0xff]
      %v406 = vld [vmem:[%s1 + $0x60] sm:$0xff]
      %v407 = vld [vmem:[%s1 + $0x68] sm:$0xff]
      %v408 = vld [vmem:[%s1 + $0x70] sm:$0xff]
      %v409 = vld [vmem:[%s1 + $0x78] sm:$0xff]
      %s410 = scalar_lea.vmem %s379, 1
      %v411 = vld [vmem:[%s410] ss:$2 sm:$0xff]
      %s412 = scalar_lea.vmem %s379, 17
      %v413 = vld [vmem:[%s412] ss:$2 sm:$0xff]
      %s414 = scalar_lea.vmem %s1, 128
      %v415 = vld [vmem:[%s414] sm:$0xff]
      %v416 = vld [vmem:[%s414 + $0x8] sm:$0xff]
      %v417 = vld [vmem:[%s414 + $0x10] sm:$0xff]
      %v418 = vld [vmem:[%s414 + $0x18] sm:$0xff]
      %v419 = vld [vmem:[%s414 + $0x20] sm:$0xff]
      %v420 = vld [vmem:[%s414 + $0x28] sm:$0xff]
      %v421 = vld [vmem:[%s414 + $0x30] sm:$0xff]
      %v422 = vld [vmem:[%s414 + $0x38] sm:$0xff]
      %v423 = vld [vmem:[%s414 + $0x40] sm:$0xff]
      %v424 = vld [vmem:[%s414 + $0x48] sm:$0xff]
      %v425 = vld [vmem:[%s414 + $0x50] sm:$0xff]
      %v426 = vld [vmem:[%s414 + $0x58] sm:$0xff]
      %v427 = vld [vmem:[%s414 + $0x60] sm:$0xff]
      %v428 = vld [vmem:[%s414 + $0x68] sm:$0xff]
      %v429 = vld [vmem:[%s414 + $0x70] sm:$0xff]
      %v430 = vld [vmem:[%s414 + $0x78] sm:$0xff]
      %431 = vmatpush.msra.mxu0 %v430
      %432 = vmatpush.msra.mxu0 %v429
      %433 = vmatpush.msra.mxu0 %v428
      %434 = vmatpush.msra.mxu0 %v427
      %435 = vmatpush.msra.mxu0 %v426
      %436 = vmatpush.msra.mxu0 %v425
      %437 = vmatpush.msra.mxu0 %v424
      %438 = vmatpush.msra.mxu0 %v423
      %439 = vmatpush.msra.mxu0 %v422
      %440 = vmatpush.msra.mxu0 %v421
      %441 = vmatpush.msra.mxu0 %v420
      %442 = vmatpush.msra.mxu0 %v419
      %443 = vmatpush.msra.mxu0 %v418
      %444 = vmatpush.msra.mxu0 %v417
      %445 = vmatpush.msra.mxu0 %v416
      %446 = vmatpush.msra.mxu0 %v415
      %447 = vmatmul.f32.gmra.mxu0 %v411
      %v448 = vpop.f32.mrf.mxu0
      %v449 = vadd.f32 0.0, %v448
      %450 = vmatmul.f32.gmra.mxu0 %v413
      %v451 = vpop.f32.mrf.mxu0
      %v452 = vadd.f32 0.0, %v451
      %453 = vdwg.mxu0
      %454 = vmatpush.msra.mxu0 %v409
      %455 = vmatpush.msra.mxu0 %v408
      %456 = vmatpush.msra.mxu0 %v407
      %457 = vmatpush.msra.mxu0 %v406
      %458 = vmatpush.msra.mxu0 %v405
      %459 = vmatpush.msra.mxu0 %v404
      %460 = vmatpush.msra.mxu0 %v403
      %461 = vmatpush.msra.mxu0 %v402
      %462 = vmatpush.msra.mxu0 %v401
      %463 = vmatpush.msra.mxu0 %v400
      %464 = vmatpush.msra.mxu0 %v399
      %465 = vmatpush.msra.mxu0 %v398
      %466 = vmatpush.msra.mxu0 %v397
      %467 = vmatpush.msra.mxu0 %v396
      %468 = vmatpush.msra.mxu0 %v395
      %469 = vmatpush.msra.mxu0 %v394
      %470 = vmatmul.f32.gmra.mxu0 %v391
      %v471 = vpop.f32.mrf.mxu0
      %v472 = vadd.f32 %v449, %v471
      %473 = vmatmul.f32.gmra.mxu0 %v393
      %v474 = vpop.f32.mrf.mxu0
      %v475 = vadd.f32 %v452, %v474
      %476 = vdwg.mxu0
      %s477 = scalar_lea.vmem %s379, 2
      %v478 = vld [vmem:[%s477] ss:$2 sm:$0xff]
      %s479 = scalar_lea.vmem %s379, 18
      %v480 = vld [vmem:[%s479] ss:$2 sm:$0xff]
      %s481 = scalar_lea.vmem %s1, 256
      %v482 = vld [vmem:[%s481] sm:$0xff]
      %v483 = vld [vmem:[%s481 + $0x8] sm:$0xff]
      %v484 = vld [vmem:[%s481 + $0x10] sm:$0xff]
      %v485 = vld [vmem:[%s481 + $0x18] sm:$0xff]
      %v486 = vld [vmem:[%s481 + $0x20] sm:$0xff]
      %v487 = vld [vmem:[%s481 + $0x28] sm:$0xff]
      %v488 = vld [vmem:[%s481 + $0x30] sm:$0xff]
      %v489 = vld [vmem:[%s481 + $0x38] sm:$0xff]
      %v490 = vld [vmem:[%s481 + $0x40] sm:$0xff]
      %v491 = vld [vmem:[%s481 + $0x48] sm:$0xff]
      %v492 = vld [vmem:[%s481 + $0x50] sm:$0xff]
      %v493 = vld [vmem:[%s481 + $0x58] sm:$0xff]
      %v494 = vld [vmem:[%s481 + $0x60] sm:$0xff]
      %v495 = vld [vmem:[%s481 + $0x68] sm:$0xff]
      %v496 = vld [vmem:[%s481 + $0x70] sm:$0xff]
      %v497 = vld [vmem:[%s481 + $0x78] sm:$0xff]
      %498 = vmatpush.msra.mxu0 %v497
      %499 = vmatpush.msra.mxu0 %v496
      %500 = vmatpush.msra.mxu0 %v495
      %501 = vmatpush.msra.mxu0 %v494
      %502 = vmatpush.msra.mxu0 %v493
      %503 = vmatpush.msra.mxu0 %v492
      %504 = vmatpush.msra.mxu0 %v491
      %505 = vmatpush.msra.mxu0 %v490
      %506 = vmatpush.msra.mxu0 %v489
      %507 = vmatpush.msra.mxu0 %v488
      %508 = vmatpush.msra.mxu0 %v487
      %509 = vmatpush.msra.mxu0 %v486
      %510 = vmatpush.msra.mxu0 %v485
      %511 = vmatpush.msra.mxu0 %v484
      %512 = vmatpush.msra.mxu0 %v483
      %513 = vmatpush.msra.mxu0 %v482
      %514 = vmatmul.f32.gmra.mxu0 %v478
      %v515 = vpop.f32.mrf.mxu0
      %v516 = vadd.f32 0.0, %v515
      %517 = vmatmul.f32.gmra.mxu0 %v480
      %v518 = vpop.f32.mrf.mxu0
      %v519 = vadd.f32 0.0, %v518
      %520 = vdwg.mxu0
      %v521 = vadd.f32 %v472, %v516
      %v522 = vadd.f32 %v475, %v519
      %s523 = scalar_lea.vmem %s379, 3
      %v524 = vld [vmem:[%s523] ss:$2 sm:$0xff]
      %s525 = scalar_lea.vmem %s379, 19
      %v526 = vld [vmem:[%s525] ss:$2 sm:$0xff]
      %s527 = scalar_lea.vmem %s1, 384
      %v528 = vld [vmem:[%s527] sm:$0xff]
      %v529 = vld [vmem:[%s527 + $0x8] sm:$0xff]
      %v530 = vld [vmem:[%s527 + $0x10] sm:$0xff]
      %v531 = vld [vmem:[%s527 + $0x18] sm:$0xff]
      %v532 = vld [vmem:[%s527 + $0x20] sm:$0xff]
      %v533 = vld [vmem:[%s527 + $0x28] sm:$0xff]
      %v534 = vld [vmem:[%s527 + $0x30] sm:$0xff]
      %v535 = vld [vmem:[%s527 + $0x38] sm:$0xff]
      %v536 = vld [vmem:[%s527 + $0x40] sm:$0xff]
      %v537 = vld [vmem:[%s527 + $0x48] sm:$0xff]
      %v538 = vld [vmem:[%s527 + $0x50] sm:$0xff]
      %v539 = vld [vmem:[%s527 + $0x58] sm:$0xff]
      %v540 = vld [vmem:[%s527 + $0x60] sm:$0xff]
      %v541 = vld [vmem:[%s527 + $0x68] sm:$0xff]
      %v542 = vld [vmem:[%s527 + $0x70] sm:$0xff]
      %v543 = vld [vmem:[%s527 + $0x78] sm:$0xff]
      %544 = vmatpush.msra.mxu0 %v543
      %545 = vmatpush.msra.mxu0 %v542
      %546 = vmatpush.msra.mxu0 %v541
      %547 = vmatpush.msra.mxu0 %v540
      %548 = vmatpush.msra.mxu0 %v539
      %549 = vmatpush.msra.mxu0 %v538
      %550 = vmatpush.msra.mxu0 %v537
      %551 = vmatpush.msra.mxu0 %v536
      %552 = vmatpush.msra.mxu0 %v535
      %553 = vmatpush.msra.mxu0 %v534
      %554 = vmatpush.msra.mxu0 %v533
      %555 = vmatpush.msra.mxu0 %v532
      %556 = vmatpush.msra.mxu0 %v531
      %557 = vmatpush.msra.mxu0 %v530
      %558 = vmatpush.msra.mxu0 %v529
      %559 = vmatpush.msra.mxu0 %v528
      %560 = vmatmul.f32.gmra.mxu0 %v524
      %v561 = vpop.f32.mrf.mxu0
      %v562 = vadd.f32 0.0, %v561
      %563 = vmatmul.f32.gmra.mxu0 %v526
      %v564 = vpop.f32.mrf.mxu0
      %v565 = vadd.f32 0.0, %v564
      %566 = vdwg.mxu0
      %v567 = vadd.f32 %v521, %v562
      %v568 = vadd.f32 %v522, %v565
      %v569 = vld [vmem:[%s2] sm:$0x1]
      %v571 = vperm.slane %v569, 0
      %v573 = vadd.f32 %v567, %v571
      %v574 = vadd.f32 %v568, %v571
      %vm575 = vcmp.ge.f32.partialorder %v573, 0.0
      %vm576 = vcmp.ge.f32.partialorder %v574, 0.0
      %v577 = vmul.f32 %v573, 0.2
      %v578 = vmul.f32 %v574, 0.2
      %v579 = vsel %vm575, %v573, %v577
      %v580 = vsel %vm576, %v574, %v578
      %581 = vst [vmem:[#allocation2 + $0x1] sm:$0xff] %v579
      %582 = vst [vmem:[#allocation2 + $0x9] sm:$0xff] %v580
      %v583 = vld [vmem:[#allocation2] ss:$2 sm:$0xff]
      %v584 = vld [vmem:[%s3] sm:$0xff]
      %v585 = vld [vmem:[%s3 + $0x8] sm:$0xff]
      %v586 = vld [vmem:[%s3 + $0x10] sm:$0xff]
      %v587 = vld [vmem:[%s3 + $0x18] sm:$0xff]
      %v588 = vld [vmem:[%s3 + $0x20] sm:$0xff]
      %v589 = vld [vmem:[%s3 + $0x28] sm:$0xff]
      %v590 = vld [vmem:[%s3 + $0x30] sm:$0xff]
      %v591 = vld [vmem:[%s3 + $0x38] sm:$0xff]
      %v592 = vld [vmem:[%s3 + $0x40] sm:$0xff]
      %v593 = vld [vmem:[%s3 + $0x48] sm:$0xff]
      %v594 = vld [vmem:[%s3 + $0x50] sm:$0xff]
      %v595 = vld [vmem:[%s3 + $0x58] sm:$0xff]
      %v596 = vld [vmem:[%s3 + $0x60] sm:$0xff]
      %v597 = vld [vmem:[%s3 + $0x68] sm:$0xff]
      %v598 = vld [vmem:[%s3 + $0x70] sm:$0xff]
      %v599 = vld [vmem:[%s3 + $0x78] sm:$0xff]
      %s600 = scalar_lea.vmem [#allocation2], 1
      %v601 = vld [vmem:[%s600] ss:$2 sm:$0xff]
      %s602 = scalar_lea.vmem %s3, 128
      %v603 = vld [vmem:[%s602] sm:$0xff]
      %v604 = vld [vmem:[%s602 + $0x8] sm:$0xff]
      %v605 = vld [vmem:[%s602 + $0x10] sm:$0xff]
      %v606 = vld [vmem:[%s602 + $0x18] sm:$0xff]
      %v607 = vld [vmem:[%s602 + $0x20] sm:$0xff]
      %v608 = vld [vmem:[%s602 + $0x28] sm:$0xff]
      %v609 = vld [vmem:[%s602 + $0x30] sm:$0xff]
      %v610 = vld [vmem:[%s602 + $0x38] sm:$0xff]
      %v611 = vld [vmem:[%s602 + $0x40] sm:$0xff]
      %v612 = vld [vmem:[%s602 + $0x48] sm:$0xff]
      %v613 = vld [vmem:[%s602 + $0x50] sm:$0xff]
      %v614 = vld [vmem:[%s602 + $0x58] sm:$0xff]
      %v615 = vld [vmem:[%s602 + $0x60] sm:$0xff]
      %v616 = vld [vmem:[%s602 + $0x68] sm:$0xff]
      %v617 = vld [vmem:[%s602 + $0x70] sm:$0xff]
      %v618 = vld [vmem:[%s602 + $0x78] sm:$0xff]
      %619 = vmatpush.msra.mxu0 %v618
      %620 = vmatpush.msra.mxu0 %v617
      %621 = vmatpush.msra.mxu0 %v616
      %622 = vmatpush.msra.mxu0 %v615
      %623 = vmatpush.msra.mxu0 %v614
      %624 = vmatpush.msra.mxu0 %v613
      %625 = vmatpush.msra.mxu0 %v612
      %626 = vmatpush.msra.mxu0 %v611
      %627 = vmatpush.msra.mxu0 %v610
      %628 = vmatpush.msra.mxu0 %v609
      %629 = vmatpush.msra.mxu0 %v608
      %630 = vmatpush.msra.mxu0 %v607
      %631 = vmatpush.msra.mxu0 %v606
      %632 = vmatpush.msra.mxu0 %v605
      %633 = vmatpush.msra.mxu0 %v604
      %634 = vmatpush.msra.mxu0 %v603
      %635 = vmatmul.f32.gmra.mxu0 %v601
      %v636 = vpop.f32.mrf.mxu0
      %v637 = vadd.f32 0.0, %v636
      %638 = vdwg.mxu0
      %639 = vmatpush.msra.mxu0 %v599
      %640 = vmatpush.msra.mxu0 %v598
      %641 = vmatpush.msra.mxu0 %v597
      %642 = vmatpush.msra.mxu0 %v596
      %643 = vmatpush.msra.mxu0 %v595
      %644 = vmatpush.msra.mxu0 %v594
      %645 = vmatpush.msra.mxu0 %v593
      %646 = vmatpush.msra.mxu0 %v592
      %647 = vmatpush.msra.mxu0 %v591
      %648 = vmatpush.msra.mxu0 %v590
      %649 = vmatpush.msra.mxu0 %v589
      %650 = vmatpush.msra.mxu0 %v588
      %651 = vmatpush.msra.mxu0 %v587
      %652 = vmatpush.msra.mxu0 %v586
      %653 = vmatpush.msra.mxu0 %v585
      %654 = vmatpush.msra.mxu0 %v584
      %655 = vmatmul.f32.gmra.mxu0 %v583
      %v656 = vpop.f32.mrf.mxu0
      %v657 = vadd.f32 %v637, %v656
      %658 = vdwg.mxu0
      %s659 = scalar_lea.vmem [#allocation2], 2
      %v660 = vld [vmem:[%s659] ss:$2 sm:$0xff]
      %s661 = scalar_lea.vmem %s3, 256
      %v662 = vld [vmem:[%s661] sm:$0xff]
      %v663 = vld [vmem:[%s661 + $0x8] sm:$0xff]
      %v664 = vld [vmem:[%s661 + $0x10] sm:$0xff]
      %v665 = vld [vmem:[%s661 + $0x18] sm:$0xff]
      %v666 = vld [vmem:[%s661 + $0x20] sm:$0xff]
      %v667 = vld [vmem:[%s661 + $0x28] sm:$0xff]
      %v668 = vld [vmem:[%s661 + $0x30] sm:$0xff]
      %v669 = vld [vmem:[%s661 + $0x38] sm:$0xff]
      %v670 = vld [vmem:[%s661 + $0x40] sm:$0xff]
      %v671 = vld [vmem:[%s661 + $0x48] sm:$0xff]
      %v672 = vld [vmem:[%s661 + $0x50] sm:$0xff]
      %v673 = vld [vmem:[%s661 + $0x58] sm:$0xff]
      %v674 = vld [vmem:[%s661 + $0x60] sm:$0xff]
      %v675 = vld [vmem:[%s661 + $0x68] sm:$0xff]
      %v676 = vld [vmem:[%s661 + $0x70] sm:$0xff]
      %v677 = vld [vmem:[%s661 + $0x78] sm:$0xff]
      %678 = vmatpush.msra.mxu0 %v677
      %679 = vmatpush.msra.mxu0 %v676
      %680 = vmatpush.msra.mxu0 %v675
      %681 = vmatpush.msra.mxu0 %v674
      %682 = vmatpush.msra.mxu0 %v673
      %683 = vmatpush.msra.mxu0 %v672
      %684 = vmatpush.msra.mxu0 %v671
      %685 = vmatpush.msra.mxu0 %v670
      %686 = vmatpush.msra.mxu0 %v669
      %687 = vmatpush.msra.mxu0 %v668
      %688 = vmatpush.msra.mxu0 %v667
      %689 = vmatpush.msra.mxu0 %v666
      %690 = vmatpush.msra.mxu0 %v665
      %691 = vmatpush.msra.mxu0 %v664
      %692 = vmatpush.msra.mxu0 %v663
      %693 = vmatpush.msra.mxu0 %v662
      %694 = vmatmul.f32.gmra.mxu0 %v660
      %v695 = vpop.f32.mrf.mxu0
      %v696 = vadd.f32 0.0, %v695
      %697 = vdwg.mxu0
      %v698 = vadd.f32 %v657, %v696
      %s699 = scalar_lea.vmem [#allocation2], 3
      %v700 = vld [vmem:[%s699] ss:$2 sm:$0xff]
      %s701 = scalar_lea.vmem %s3, 384
      %v702 = vld [vmem:[%s701] sm:$0xff]
      %v703 = vld [vmem:[%s701 + $0x8] sm:$0xff]
      %v704 = vld [vmem:[%s701 + $0x10] sm:$0xff]
      %v705 = vld [vmem:[%s701 + $0x18] sm:$0xff]
      %v706 = vld [vmem:[%s701 + $0x20] sm:$0xff]
      %v707 = vld [vmem:[%s701 + $0x28] sm:$0xff]
      %v708 = vld [vmem:[%s701 + $0x30] sm:$0xff]
      %v709 = vld [vmem:[%s701 + $0x38] sm:$0xff]
      %v710 = vld [vmem:[%s701 + $0x40] sm:$0xff]
      %v711 = vld [vmem:[%s701 + $0x48] sm:$0xff]
      %v712 = vld [vmem:[%s701 + $0x50] sm:$0xff]
      %v713 = vld [vmem:[%s701 + $0x58] sm:$0xff]
      %v714 = vld [vmem:[%s701 + $0x60] sm:$0xff]
      %v715 = vld [vmem:[%s701 + $0x68] sm:$0xff]
      %v716 = vld [vmem:[%s701 + $0x70] sm:$0xff]
      %v717 = vld [vmem:[%s701 + $0x78] sm:$0xff]
      %718 = vmatpush.msra.mxu0 %v717
      %719 = vmatpush.msra.mxu0 %v716
      %720 = vmatpush.msra.mxu0 %v715
      %721 = vmatpush.msra.mxu0 %v714
      %722 = vmatpush.msra.mxu0 %v713
      %723 = vmatpush.msra.mxu0 %v712
      %724 = vmatpush.msra.mxu0 %v711
      %725 = vmatpush.msra.mxu0 %v710
      %726 = vmatpush.msra.mxu0 %v709
      %727 = vmatpush.msra.mxu0 %v708
      %728 = vmatpush.msra.mxu0 %v707
      %729 = vmatpush.msra.mxu0 %v706
      %730 = vmatpush.msra.mxu0 %v705
      %731 = vmatpush.msra.mxu0 %v704
      %732 = vmatpush.msra.mxu0 %v703
      %733 = vmatpush.msra.mxu0 %v702
      %734 = vmatmul.f32.gmra.mxu0 %v700
      %v735 = vpop.f32.mrf.mxu0
      %v736 = vadd.f32 0.0, %v735
      %737 = vdwg.mxu0
      %v738 = vadd.f32 %v698, %v736
      %v739 = vld [vmem:[%s4] sm:$0x1]
      %v741 = vperm.slane %v739, 0
      %v743 = vadd.f32 %v738, %v741
      %vm744 = vcmp.ge.f32.partialorder %v743, 0.0
      %v745 = vmul.f32 %v743, 0.2
      %v746 = vsel %vm744, %v743, %v745
      %747 = vst [vmem:[#allocation3 + $0x1] sm:$0xff] %v746
      %v748 = vld [vmem:[#allocation3] ss:$2 sm:$0xf]
      %v749 = vld [vmem:[%s5] sm:$0xff]
      %v750 = vld [vmem:[%s5 + $0x8] sm:$0xff]
      %v751 = vld [vmem:[%s5 + $0x10] sm:$0xff]
      %v752 = vld [vmem:[%s5 + $0x18] sm:$0xff]
      %v753 = vld [vmem:[%s5 + $0x20] sm:$0xff]
      %v754 = vld [vmem:[%s5 + $0x28] sm:$0xff]
      %v755 = vld [vmem:[%s5 + $0x30] sm:$0xff]
      %v756 = vld [vmem:[%s5 + $0x38] sm:$0xff]
      %v757 = vld [vmem:[%s5 + $0x40] sm:$0xff]
      %v758 = vld [vmem:[%s5 + $0x48] sm:$0xff]
      %v759 = vld [vmem:[%s5 + $0x50] sm:$0xff]
      %v760 = vld [vmem:[%s5 + $0x58] sm:$0xff]
      %v761 = vld [vmem:[%s5 + $0x60] sm:$0xff]
      %v762 = vld [vmem:[%s5 + $0x68] sm:$0xff]
      %v763 = vld [vmem:[%s5 + $0x70] sm:$0xff]
      %v764 = vld [vmem:[%s5 + $0x78] sm:$0xff]
      %s765 = scalar_lea.vmem [#allocation3], 1
      %v766 = vld [vmem:[%s765] ss:$2 sm:$0xf]
      %s767 = scalar_lea.vmem %s5, 128
      %v768 = vld [vmem:[%s767] sm:$0xff]
      %v769 = vld [vmem:[%s767 + $0x8] sm:$0xff]
      %v770 = vld [vmem:[%s767 + $0x10] sm:$0xff]
      %v771 = vld [vmem:[%s767 + $0x18] sm:$0xff]
      %v772 = vld [vmem:[%s767 + $0x20] sm:$0xff]
      %v773 = vld [vmem:[%s767 + $0x28] sm:$0xff]
      %v774 = vld [vmem:[%s767 + $0x30] sm:$0xff]
      %v775 = vld [vmem:[%s767 + $0x38] sm:$0xff]
      %v776 = vld [vmem:[%s767 + $0x40] sm:$0xff]
      %v777 = vld [vmem:[%s767 + $0x48] sm:$0xff]
      %v778 = vld [vmem:[%s767 + $0x50] sm:$0xff]
      %v779 = vld [vmem:[%s767 + $0x58] sm:$0xff]
      %v780 = vld [vmem:[%s767 + $0x60] sm:$0xff]
      %v781 = vld [vmem:[%s767 + $0x68] sm:$0xff]
      %v782 = vld [vmem:[%s767 + $0x70] sm:$0xff]
      %v783 = vld [vmem:[%s767 + $0x78] sm:$0xff]
      %784 = vmatpush.msra.mxu0 %v783
      %785 = vmatpush.msra.mxu0 %v782
      %786 = vmatpush.msra.mxu0 %v781
      %787 = vmatpush.msra.mxu0 %v780
      %788 = vmatpush.msra.mxu0 %v779
      %789 = vmatpush.msra.mxu0 %v778
      %790 = vmatpush.msra.mxu0 %v777
      %791 = vmatpush.msra.mxu0 %v776
      %792 = vmatpush.msra.mxu0 %v775
      %793 = vmatpush.msra.mxu0 %v774
      %794 = vmatpush.msra.mxu0 %v773
      %795 = vmatpush.msra.mxu0 %v772
      %796 = vmatpush.msra.mxu0 %v771
      %797 = vmatpush.msra.mxu0 %v770
      %798 = vmatpush.msra.mxu0 %v769
      %799 = vmatpush.msra.mxu0 %v768
      %800 = vmatmul.f32.gmra.mxu0 %v766
      %v801 = vpop.f32.mrf.mxu0
      %v802 = vadd.f32 0.0, %v801
      %803 = vdwg.mxu0
      %804 = vmatpush.msra.mxu0 %v764
      %805 = vmatpush.msra.mxu0 %v763
      %806 = vmatpush.msra.mxu0 %v762
      %807 = vmatpush.msra.mxu0 %v761
      %808 = vmatpush.msra.mxu0 %v760
      %809 = vmatpush.msra.mxu0 %v759
      %810 = vmatpush.msra.mxu0 %v758
      %811 = vmatpush.msra.mxu0 %v757
      %812 = vmatpush.msra.mxu0 %v756
      %813 = vmatpush.msra.mxu0 %v755
      %814 = vmatpush.msra.mxu0 %v754
      %815 = vmatpush.msra.mxu0 %v753
      %816 = vmatpush.msra.mxu0 %v752
      %817 = vmatpush.msra.mxu0 %v751
      %818 = vmatpush.msra.mxu0 %v750
      %819 = vmatpush.msra.mxu0 %v749
      %820 = vmatmul.f32.gmra.mxu0 %v748
      %v821 = vpop.f32.mrf.mxu0
      %v822 = vadd.f32 %v802, %v821
      %823 = vdwg.mxu0
      %s824 = scalar_lea.vmem [#allocation3], 2
      %v825 = vld [vmem:[%s824] ss:$2 sm:$0xf]
      %s826 = scalar_lea.vmem %s5, 256
      %v827 = vld [vmem:[%s826] sm:$0xff]
      %v828 = vld [vmem:[%s826 + $0x8] sm:$0xff]
      %v829 = vld [vmem:[%s826 + $0x10] sm:$0xff]
      %v830 = vld [vmem:[%s826 + $0x18] sm:$0xff]
      %v831 = vld [vmem:[%s826 + $0x20] sm:$0xff]
      %v832 = vld [vmem:[%s826 + $0x28] sm:$0xff]
      %v833 = vld [vmem:[%s826 + $0x30] sm:$0xff]
      %v834 = vld [vmem:[%s826 + $0x38] sm:$0xff]
      %v835 = vld [vmem:[%s826 + $0x40] sm:$0xff]
      %v836 = vld [vmem:[%s826 + $0x48] sm:$0xff]
      %v837 = vld [vmem:[%s826 + $0x50] sm:$0xff]
      %v838 = vld [vmem:[%s826 + $0x58] sm:$0xff]
      %v839 = vld [vmem:[%s826 + $0x60] sm:$0xff]
      %v840 = vld [vmem:[%s826 + $0x68] sm:$0xff]
      %v841 = vld [vmem:[%s826 + $0x70] sm:$0xff]
      %v842 = vld [vmem:[%s826 + $0x78] sm:$0xff]
      %843 = vmatpush.msra.mxu0 %v842
      %844 = vmatpush.msra.mxu0 %v841
      %845 = vmatpush.msra.mxu0 %v840
      %846 = vmatpush.msra.mxu0 %v839
      %847 = vmatpush.msra.mxu0 %v838
      %848 = vmatpush.msra.mxu0 %v837
      %849 = vmatpush.msra.mxu0 %v836
      %850 = vmatpush.msra.mxu0 %v835
      %851 = vmatpush.msra.mxu0 %v834
      %852 = vmatpush.msra.mxu0 %v833
      %853 = vmatpush.msra.mxu0 %v832
      %854 = vmatpush.msra.mxu0 %v831
      %855 = vmatpush.msra.mxu0 %v830
      %856 = vmatpush.msra.mxu0 %v829
      %857 = vmatpush.msra.mxu0 %v828
      %858 = vmatpush.msra.mxu0 %v827
      %859 = vmatmul.f32.gmra.mxu0 %v825
      %v860 = vpop.f32.mrf.mxu0
      %v861 = vadd.f32 0.0, %v860
      %862 = vdwg.mxu0
      %v863 = vadd.f32 %v822, %v861
      %s864 = scalar_lea.vmem [#allocation3], 3
      %v865 = vld [vmem:[%s864] ss:$2 sm:$0xf]
      %s866 = scalar_lea.vmem %s5, 384
      %v867 = vld [vmem:[%s866] sm:$0xff]
      %v868 = vld [vmem:[%s866 + $0x8] sm:$0xff]
      %v869 = vld [vmem:[%s866 + $0x10] sm:$0xff]
      %v870 = vld [vmem:[%s866 + $0x18] sm:$0xff]
      %v871 = vld [vmem:[%s866 + $0x20] sm:$0xff]
      %v872 = vld [vmem:[%s866 + $0x28] sm:$0xff]
      %v873 = vld [vmem:[%s866 + $0x30] sm:$0xff]
      %v874 = vld [vmem:[%s866 + $0x38] sm:$0xff]
      %v875 = vld [vmem:[%s866 + $0x40] sm:$0xff]
      %v876 = vld [vmem:[%s866 + $0x48] sm:$0xff]
      %v877 = vld [vmem:[%s866 + $0x50] sm:$0xff]
      %v878 = vld [vmem:[%s866 + $0x58] sm:$0xff]
      %v879 = vld [vmem:[%s866 + $0x60] sm:$0xff]
      %v880 = vld [vmem:[%s866 + $0x68] sm:$0xff]
      %v881 = vld [vmem:[%s866 + $0x70] sm:$0xff]
      %v882 = vld [vmem:[%s866 + $0x78] sm:$0xff]
      %883 = vmatpush.msra.mxu0 %v882
      %884 = vmatpush.msra.mxu0 %v881
      %885 = vmatpush.msra.mxu0 %v880
      %886 = vmatpush.msra.mxu0 %v879
      %887 = vmatpush.msra.mxu0 %v878
      %888 = vmatpush.msra.mxu0 %v877
      %889 = vmatpush.msra.mxu0 %v876
      %890 = vmatpush.msra.mxu0 %v875
      %891 = vmatpush.msra.mxu0 %v874
      %892 = vmatpush.msra.mxu0 %v873
      %893 = vmatpush.msra.mxu0 %v872
      %894 = vmatpush.msra.mxu0 %v871
      %895 = vmatpush.msra.mxu0 %v870
      %896 = vmatpush.msra.mxu0 %v869
      %897 = vmatpush.msra.mxu0 %v868
      %898 = vmatpush.msra.mxu0 %v867
      %899 = vmatmul.f32.gmra.mxu0 %v865
      %v900 = vpop.f32.mrf.mxu0
      %v901 = vadd.f32 0.0, %v900
      %902 = vdwg.mxu0
      %v903 = vadd.f32 %v863, %v901
      %v904 = vld [vmem:[%s6] sm:$0x1]
      %v906 = vperm.slane %v904, 0
      %v908 = vadd.f32 %v903, %v906
      %vm909 = vcmp.ge.f32.partialorder %v908, 0.0
      %v910 = vmul.f32 %v908, 0.2
      %v911 = vsel %vm909, %v908, %v910
      %912 = vst [vmem:[#allocation4 + $0x1] sm:$0xf] %v911
      %v913 = vld [vmem:[#allocation4] ss:$2 sm:$0x3]
      %v914 = vld [vmem:[%s7] sm:$0xff]
      %v915 = vld [vmem:[%s7 + $0x8] sm:$0xff]
      %v916 = vld [vmem:[%s7 + $0x10] sm:$0xff]
      %v917 = vld [vmem:[%s7 + $0x18] sm:$0xff]
      %v918 = vld [vmem:[%s7 + $0x20] sm:$0xff]
      %v919 = vld [vmem:[%s7 + $0x28] sm:$0xff]
      %v920 = vld [vmem:[%s7 + $0x30] sm:$0xff]
      %v921 = vld [vmem:[%s7 + $0x38] sm:$0xff]
      %v922 = vld [vmem:[%s7 + $0x40] sm:$0xff]
      %v923 = vld [vmem:[%s7 + $0x48] sm:$0xff]
      %v924 = vld [vmem:[%s7 + $0x50] sm:$0xff]
      %v925 = vld [vmem:[%s7 + $0x58] sm:$0xff]
      %v926 = vld [vmem:[%s7 + $0x60] sm:$0xff]
      %v927 = vld [vmem:[%s7 + $0x68] sm:$0xff]
      %v928 = vld [vmem:[%s7 + $0x70] sm:$0xff]
      %v929 = vld [vmem:[%s7 + $0x78] sm:$0xff]
      %s930 = scalar_lea.vmem [#allocation4], 1
      %v931 = vld [vmem:[%s930] ss:$2 sm:$0x3]
      %s932 = scalar_lea.vmem %s7, 128
      %v933 = vld [vmem:[%s932] sm:$0xff]
      %v934 = vld [vmem:[%s932 + $0x8] sm:$0xff]
      %v935 = vld [vmem:[%s932 + $0x10] sm:$0xff]
      %v936 = vld [vmem:[%s932 + $0x18] sm:$0xff]
      %v937 = vld [vmem:[%s932 + $0x20] sm:$0xff]
      %v938 = vld [vmem:[%s932 + $0x28] sm:$0xff]
      %v939 = vld [vmem:[%s932 + $0x30] sm:$0xff]
      %v940 = vld [vmem:[%s932 + $0x38] sm:$0xff]
      %v941 = vld [vmem:[%s932 + $0x40] sm:$0xff]
      %v942 = vld [vmem:[%s932 + $0x48] sm:$0xff]
      %v943 = vld [vmem:[%s932 + $0x50] sm:$0xff]
      %v944 = vld [vmem:[%s932 + $0x58] sm:$0xff]
      %v945 = vld [vmem:[%s932 + $0x60] sm:$0xff]
      %v946 = vld [vmem:[%s932 + $0x68] sm:$0xff]
      %v947 = vld [vmem:[%s932 + $0x70] sm:$0xff]
      %v948 = vld [vmem:[%s932 + $0x78] sm:$0xff]
      %949 = vmatpush.msra.mxu0 %v948
      %950 = vmatpush.msra.mxu0 %v947
      %951 = vmatpush.msra.mxu0 %v946
      %952 = vmatpush.msra.mxu0 %v945
      %953 = vmatpush.msra.mxu0 %v944
      %954 = vmatpush.msra.mxu0 %v943
      %955 = vmatpush.msra.mxu0 %v942
      %956 = vmatpush.msra.mxu0 %v941
      %957 = vmatpush.msra.mxu0 %v940
      %958 = vmatpush.msra.mxu0 %v939
      %959 = vmatpush.msra.mxu0 %v938
      %960 = vmatpush.msra.mxu0 %v937
      %961 = vmatpush.msra.mxu0 %v936
      %962 = vmatpush.msra.mxu0 %v935
      %963 = vmatpush.msra.mxu0 %v934
      %964 = vmatpush.msra.mxu0 %v933
      %965 = vmatmul.f32.gmra.mxu0 %v931
      %v966 = vpop.f32.mrf.mxu0
      %v967 = vadd.f32 0.0, %v966
      %968 = vdwg.mxu0
      %969 = vmatpush.msra.mxu0 %v929
      %970 = vmatpush.msra.mxu0 %v928
      %971 = vmatpush.msra.mxu0 %v927
      %972 = vmatpush.msra.mxu0 %v926
      %973 = vmatpush.msra.mxu0 %v925
      %974 = vmatpush.msra.mxu0 %v924
      %975 = vmatpush.msra.mxu0 %v923
      %976 = vmatpush.msra.mxu0 %v922
      %977 = vmatpush.msra.mxu0 %v921
      %978 = vmatpush.msra.mxu0 %v920
      %979 = vmatpush.msra.mxu0 %v919
      %980 = vmatpush.msra.mxu0 %v918
      %981 = vmatpush.msra.mxu0 %v917
      %982 = vmatpush.msra.mxu0 %v916
      %983 = vmatpush.msra.mxu0 %v915
      %984 = vmatpush.msra.mxu0 %v914
      %985 = vmatmul.f32.gmra.mxu0 %v913
      %v986 = vpop.f32.mrf.mxu0
      %v987 = vadd.f32 %v967, %v986
      %988 = vdwg.mxu0
      %s989 = scalar_lea.vmem [#allocation4], 2
      %v990 = vld [vmem:[%s989] ss:$2 sm:$0x3]
      %s991 = scalar_lea.vmem %s7, 256
      %v992 = vld [vmem:[%s991] sm:$0xff]
      %v993 = vld [vmem:[%s991 + $0x8] sm:$0xff]
      %v994 = vld [vmem:[%s991 + $0x10] sm:$0xff]
      %v995 = vld [vmem:[%s991 + $0x18] sm:$0xff]
      %v996 = vld [vmem:[%s991 + $0x20] sm:$0xff]
      %v997 = vld [vmem:[%s991 + $0x28] sm:$0xff]
      %v998 = vld [vmem:[%s991 + $0x30] sm:$0xff]
      %v999 = vld [vmem:[%s991 + $0x38] sm:$0xff]
      %v1000 = vld [vmem:[%s991 + $0x40] sm:$0xff]
      %v1001 = vld [vmem:[%s991 + $0x48] sm:$0xff]
      %v1002 = vld [vmem:[%s991 + $0x50] sm:$0xff]
      %v1003 = vld [vmem:[%s991 + $0x58] sm:$0xff]
      %v1004 = vld [vmem:[%s991 + $0x60] sm:$0xff]
      %v1005 = vld [vmem:[%s991 + $0x68] sm:$0xff]
      %v1006 = vld [vmem:[%s991 + $0x70] sm:$0xff]
      %v1007 = vld [vmem:[%s991 + $0x78] sm:$0xff]
      %1008 = vmatpush.msra.mxu0 %v1007
      %1009 = vmatpush.msra.mxu0 %v1006
      %1010 = vmatpush.msra.mxu0 %v1005
      %1011 = vmatpush.msra.mxu0 %v1004
      %1012 = vmatpush.msra.mxu0 %v1003
      %1013 = vmatpush.msra.mxu0 %v1002
      %1014 = vmatpush.msra.mxu0 %v1001
      %1015 = vmatpush.msra.mxu0 %v1000
      %1016 = vmatpush.msra.mxu0 %v999
      %1017 = vmatpush.msra.mxu0 %v998
      %1018 = vmatpush.msra.mxu0 %v997
      %1019 = vmatpush.msra.mxu0 %v996
      %1020 = vmatpush.msra.mxu0 %v995
      %1021 = vmatpush.msra.mxu0 %v994
      %1022 = vmatpush.msra.mxu0 %v993
      %1023 = vmatpush.msra.mxu0 %v992
      %1024 = vmatmul.f32.gmra.mxu0 %v990
      %v1025 = vpop.f32.mrf.mxu0
      %v1026 = vadd.f32 0.0, %v1025
      %1027 = vdwg.mxu0
      %v1028 = vadd.f32 %v987, %v1026
      %s1029 = scalar_lea.vmem [#allocation4], 3
      %v1030 = vld [vmem:[%s1029] ss:$2 sm:$0x3]
      %s1031 = scalar_lea.vmem %s7, 384
      %v1032 = vld [vmem:[%s1031] sm:$0xff]
      %v1033 = vld [vmem:[%s1031 + $0x8] sm:$0xff]
      %v1034 = vld [vmem:[%s1031 + $0x10] sm:$0xff]
      %v1035 = vld [vmem:[%s1031 + $0x18] sm:$0xff]
      %v1036 = vld [vmem:[%s1031 + $0x20] sm:$0xff]
      %v1037 = vld [vmem:[%s1031 + $0x28] sm:$0xff]
      %v1038 = vld [vmem:[%s1031 + $0x30] sm:$0xff]
      %v1039 = vld [vmem:[%s1031 + $0x38] sm:$0xff]
      %v1040 = vld [vmem:[%s1031 + $0x40] sm:$0xff]
      %v1041 = vld [vmem:[%s1031 + $0x48] sm:$0xff]
      %v1042 = vld [vmem:[%s1031 + $0x50] sm:$0xff]
      %v1043 = vld [vmem:[%s1031 + $0x58] sm:$0xff]
      %v1044 = vld [vmem:[%s1031 + $0x60] sm:$0xff]
      %v1045 = vld [vmem:[%s1031 + $0x68] sm:$0xff]
      %v1046 = vld [vmem:[%s1031 + $0x70] sm:$0xff]
      %v1047 = vld [vmem:[%s1031 + $0x78] sm:$0xff]
      %1048 = vmatpush.msra.mxu0 %v1047
      %1049 = vmatpush.msra.mxu0 %v1046
      %1050 = vmatpush.msra.mxu0 %v1045
      %1051 = vmatpush.msra.mxu0 %v1044
      %1052 = vmatpush.msra.mxu0 %v1043
      %1053 = vmatpush.msra.mxu0 %v1042
      %1054 = vmatpush.msra.mxu0 %v1041
      %1055 = vmatpush.msra.mxu0 %v1040
      %1056 = vmatpush.msra.mxu0 %v1039
      %1057 = vmatpush.msra.mxu0 %v1038
      %1058 = vmatpush.msra.mxu0 %v1037
      %1059 = vmatpush.msra.mxu0 %v1036
      %1060 = vmatpush.msra.mxu0 %v1035
      %1061 = vmatpush.msra.mxu0 %v1034
      %1062 = vmatpush.msra.mxu0 %v1033
      %1063 = vmatpush.msra.mxu0 %v1032
      %1064 = vmatmul.f32.gmra.mxu0 %v1030
      %v1065 = vpop.f32.mrf.mxu0
      %v1066 = vadd.f32 0.0, %v1065
      %1067 = vdwg.mxu0
      %v1068 = vadd.f32 %v1028, %v1066
      %v1069 = vld [vmem:[%s8] sm:$0x1]
      %v1071 = vperm.slane %v1069, 0
      %v1073 = vadd.f32 %v1068, %v1071
      %vm1074 = vcmp.ge.f32.partialorder %v1073, 0.0
      %v1075 = vmul.f32 %v1073, 0.2
      %v1076 = vsel %vm1074, %v1073, %v1075
      %1077 = vst [vmem:[#allocation5 + $0x1] sm:$0x3] %v1076
      %v1078 = vld [vmem:[#allocation5] ss:$2 sm:$0x1]
      %v1079 = vld [vmem:[%s9] sm:$0xff]
      %v1080 = vld [vmem:[%s9 + $0x8] sm:$0xff]
      %v1081 = vld [vmem:[%s9 + $0x10] sm:$0xff]
      %v1082 = vld [vmem:[%s9 + $0x18] sm:$0xff]
      %v1083 = vld [vmem:[%s9 + $0x20] sm:$0xff]
      %v1084 = vld [vmem:[%s9 + $0x28] sm:$0xff]
      %v1085 = vld [vmem:[%s9 + $0x30] sm:$0xff]
      %v1086 = vld [vmem:[%s9 + $0x38] sm:$0xff]
      %v1087 = vld [vmem:[%s9 + $0x40] sm:$0xff]
      %v1088 = vld [vmem:[%s9 + $0x48] sm:$0xff]
      %v1089 = vld [vmem:[%s9 + $0x50] sm:$0xff]
      %v1090 = vld [vmem:[%s9 + $0x58] sm:$0xff]
      %v1091 = vld [vmem:[%s9 + $0x60] sm:$0xff]
      %v1092 = vld [vmem:[%s9 + $0x68] sm:$0xff]
      %v1093 = vld [vmem:[%s9 + $0x70] sm:$0xff]
      %v1094 = vld [vmem:[%s9 + $0x78] sm:$0xff]
      %s1095 = scalar_lea.vmem [#allocation5], 1
      %v1096 = vld [vmem:[%s1095] ss:$2 sm:$0x1]
      %s1097 = scalar_lea.vmem %s9, 128
      %v1098 = vld [vmem:[%s1097] sm:$0xff]
      %v1099 = vld [vmem:[%s1097 + $0x8] sm:$0xff]
      %v1100 = vld [vmem:[%s1097 + $0x10] sm:$0xff]
      %v1101 = vld [vmem:[%s1097 + $0x18] sm:$0xff]
      %v1102 = vld [vmem:[%s1097 + $0x20] sm:$0xff]
      %v1103 = vld [vmem:[%s1097 + $0x28] sm:$0xff]
      %v1104 = vld [vmem:[%s1097 + $0x30] sm:$0xff]
      %v1105 = vld [vmem:[%s1097 + $0x38] sm:$0xff]
      %v1106 = vld [vmem:[%s1097 + $0x40] sm:$0xff]
      %v1107 = vld [vmem:[%s1097 + $0x48] sm:$0xff]
      %v1108 = vld [vmem:[%s1097 + $0x50] sm:$0xff]
      %v1109 = vld [vmem:[%s1097 + $0x58] sm:$0xff]
      %v1110 = vld [vmem:[%s1097 + $0x60] sm:$0xff]
      %v1111 = vld [vmem:[%s1097 + $0x68] sm:$0xff]
      %v1112 = vld [vmem:[%s1097 + $0x70] sm:$0xff]
      %v1113 = vld [vmem:[%s1097 + $0x78] sm:$0xff]
      %1114 = vmatpush.msra.mxu0 %v1113
      %1115 = vmatpush.msra.mxu0 %v1112
      %1116 = vmatpush.msra.mxu0 %v1111
      %1117 = vmatpush.msra.mxu0 %v1110
      %1118 = vmatpush.msra.mxu0 %v1109
      %1119 = vmatpush.msra.mxu0 %v1108
      %1120 = vmatpush.msra.mxu0 %v1107
      %1121 = vmatpush.msra.mxu0 %v1106
      %1122 = vmatpush.msra.mxu0 %v1105
      %1123 = vmatpush.msra.mxu0 %v1104
      %1124 = vmatpush.msra.mxu0 %v1103
      %1125 = vmatpush.msra.mxu0 %v1102
      %1126 = vmatpush.msra.mxu0 %v1101
      %1127 = vmatpush.msra.mxu0 %v1100
      %1128 = vmatpush.msra.mxu0 %v1099
      %1129 = vmatpush.msra.mxu0 %v1098
      %1130 = vmatmul.f32.gmra.mxu0 %v1096
      %v1131 = vpop.f32.mrf.mxu0
      %v1132 = vadd.f32 0.0, %v1131
      %1133 = vdwg.mxu0
      %1134 = vmatpush.msra.mxu0 %v1094
      %1135 = vmatpush.msra.mxu0 %v1093
      %1136 = vmatpush.msra.mxu0 %v1092
      %1137 = vmatpush.msra.mxu0 %v1091
      %1138 = vmatpush.msra.mxu0 %v1090
      %1139 = vmatpush.msra.mxu0 %v1089
      %1140 = vmatpush.msra.mxu0 %v1088
      %1141 = vmatpush.msra.mxu0 %v1087
      %1142 = vmatpush.msra.mxu0 %v1086
      %1143 = vmatpush.msra.mxu0 %v1085
      %1144 = vmatpush.msra.mxu0 %v1084
      %1145 = vmatpush.msra.mxu0 %v1083
      %1146 = vmatpush.msra.mxu0 %v1082
      %1147 = vmatpush.msra.mxu0 %v1081
      %1148 = vmatpush.msra.mxu0 %v1080
      %1149 = vmatpush.msra.mxu0 %v1079
      %1150 = vmatmul.f32.gmra.mxu0 %v1078
      %v1151 = vpop.f32.mrf.mxu0
      %v1152 = vadd.f32 %v1132, %v1151
      %1153 = vdwg.mxu0
      %s1154 = scalar_lea.vmem [#allocation5], 2
      %v1155 = vld [vmem:[%s1154] ss:$2 sm:$0x1]
      %s1156 = scalar_lea.vmem %s9, 256
      %v1157 = vld [vmem:[%s1156] sm:$0xff]
      %v1158 = vld [vmem:[%s1156 + $0x8] sm:$0xff]
      %v1159 = vld [vmem:[%s1156 + $0x10] sm:$0xff]
      %v1160 = vld [vmem:[%s1156 + $0x18] sm:$0xff]
      %v1161 = vld [vmem:[%s1156 + $0x20] sm:$0xff]
      %v1162 = vld [vmem:[%s1156 + $0x28] sm:$0xff]
      %v1163 = vld [vmem:[%s1156 + $0x30] sm:$0xff]
      %v1164 = vld [vmem:[%s1156 + $0x38] sm:$0xff]
      %v1165 = vld [vmem:[%s1156 + $0x40] sm:$0xff]
      %v1166 = vld [vmem:[%s1156 + $0x48] sm:$0xff]
      %v1167 = vld [vmem:[%s1156 + $0x50] sm:$0xff]
      %v1168 = vld [vmem:[%s1156 + $0x58] sm:$0xff]
      %v1169 = vld [vmem:[%s1156 + $0x60] sm:$0xff]
      %v1170 = vld [vmem:[%s1156 + $0x68] sm:$0xff]
      %v1171 = vld [vmem:[%s1156 + $0x70] sm:$0xff]
      %v1172 = vld [vmem:[%s1156 + $0x78] sm:$0xff]
      %1173 = vmatpush.msra.mxu0 %v1172
      %1174 = vmatpush.msra.mxu0 %v1171
      %1175 = vmatpush.msra.mxu0 %v1170
      %1176 = vmatpush.msra.mxu0 %v1169
      %1177 = vmatpush.msra.mxu0 %v1168
      %1178 = vmatpush.msra.mxu0 %v1167
      %1179 = vmatpush.msra.mxu0 %v1166
      %1180 = vmatpush.msra.mxu0 %v1165
      %1181 = vmatpush.msra.mxu0 %v1164
      %1182 = vmatpush.msra.mxu0 %v1163
      %1183 = vmatpush.msra.mxu0 %v1162
      %1184 = vmatpush.msra.mxu0 %v1161
      %1185 = vmatpush.msra.mxu0 %v1160
      %1186 = vmatpush.msra.mxu0 %v1159
      %1187 = vmatpush.msra.mxu0 %v1158
      %1188 = vmatpush.msra.mxu0 %v1157
      %1189 = vmatmul.f32.gmra.mxu0 %v1155
      %v1190 = vpop.f32.mrf.mxu0
      %v1191 = vadd.f32 0.0, %v1190
      %1192 = vdwg.mxu0
      %v1193 = vadd.f32 %v1152, %v1191
      %s1194 = scalar_lea.vmem [#allocation5], 3
      %v1195 = vld [vmem:[%s1194] ss:$2 sm:$0x1]
      %s1196 = scalar_lea.vmem %s9, 384
      %v1197 = vld [vmem:[%s1196] sm:$0xff]
      %v1198 = vld [vmem:[%s1196 + $0x8] sm:$0xff]
      %v1199 = vld [vmem:[%s1196 + $0x10] sm:$0xff]
      %v1200 = vld [vmem:[%s1196 + $0x18] sm:$0xff]
      %v1201 = vld [vmem:[%s1196 + $0x20] sm:$0xff]
      %v1202 = vld [vmem:[%s1196 + $0x28] sm:$0xff]
      %v1203 = vld [vmem:[%s1196 + $0x30] sm:$0xff]
      %v1204 = vld [vmem:[%s1196 + $0x38] sm:$0xff]
      %v1205 = vld [vmem:[%s1196 + $0x40] sm:$0xff]
      %v1206 = vld [vmem:[%s1196 + $0x48] sm:$0xff]
      %v1207 = vld [vmem:[%s1196 + $0x50] sm:$0xff]
      %v1208 = vld [vmem:[%s1196 + $0x58] sm:$0xff]
      %v1209 = vld [vmem:[%s1196 + $0x60] sm:$0xff]
      %v1210 = vld [vmem:[%s1196 + $0x68] sm:$0xff]
      %v1211 = vld [vmem:[%s1196 + $0x70] sm:$0xff]
      %v1212 = vld [vmem:[%s1196 + $0x78] sm:$0xff]
      %1213 = vmatpush.msra.mxu0 %v1212
      %1214 = vmatpush.msra.mxu0 %v1211
      %1215 = vmatpush.msra.mxu0 %v1210
      %1216 = vmatpush.msra.mxu0 %v1209
      %1217 = vmatpush.msra.mxu0 %v1208
      %1218 = vmatpush.msra.mxu0 %v1207
      %1219 = vmatpush.msra.mxu0 %v1206
      %1220 = vmatpush.msra.mxu0 %v1205
      %1221 = vmatpush.msra.mxu0 %v1204
      %1222 = vmatpush.msra.mxu0 %v1203
      %1223 = vmatpush.msra.mxu0 %v1202
      %1224 = vmatpush.msra.mxu0 %v1201
      %1225 = vmatpush.msra.mxu0 %v1200
      %1226 = vmatpush.msra.mxu0 %v1199
      %1227 = vmatpush.msra.mxu0 %v1198
      %1228 = vmatpush.msra.mxu0 %v1197
      %1229 = vmatmul.f32.gmra.mxu0 %v1195
      %v1230 = vpop.f32.mrf.mxu0
      %v1231 = vadd.f32 0.0, %v1230
      %1232 = vdwg.mxu0
      %v1233 = vadd.f32 %v1193, %v1231
      %v1234 = vld [vmem:[%s10] sm:$0x1]
      %v1235 = vadd.f32 %v1233, %v1234
      %1236 = vst [vmem:[%s382] sm:$0x1] %v1235
      %p1237 = scmp.lt.s32.totalorder %s22, 1
      %s1238 = scalar_select %p1237, %s22, 1
      %s1239 = scalar_lea.vmem %s11, %s1238
      // Predicated region
      $region65: #{model_discriminate_forward.1} parent=63 // pred_check
        %p1240 = pneg %p276
      $region66: #{model_discriminate_forward.1} parent=63 // pred_check_branch
        %1242 = sbr.rel (%p1240) target = $region68
      $region67: #{model_discriminate_forward.1} parent=63 // pred_region
        _
      $region68: #{model_discriminate_forward.1} parent=63 // pred_fallthru
        _
    $region64: #{model_discriminate_forward.1} parent=5 // pred_fallthru
      _
    %p1243 = scmp.le.s32.totalorder 2, %s17
    // Predicated region
    $region69: #{model_discriminate_forward.1} parent=5 // pred_check
      %p1244 = pneg %p1243
    $region70: #{model_discriminate_forward.1} parent=5 // pred_check_branch
      %1246 = sbr.rel (%p1244) target = $region72
    $region71: #{model_discriminate_forward.1} parent=5 // pred_region
      %s1247 = ssub.s32 %s17, 2
      // Predicated region
      $region73: #{model_discriminate_forward.1} parent=71 // pred_check
        %p1248 = pneg %p282
      $region74: #{model_discriminate_forward.1} parent=71 // pred_check_branch
        %1250 = sbr.rel (%p1248) target = $region76
      $region75: #{model_discriminate_forward.1} parent=71 // pred_region
        %p1251 = scmp.lt.s32.totalorder %s23, 1
        %s1252 = scalar_select %p1251, %s23, 1
        %s1253 = scalar_lea.vmem %s11, %s1252
      $region76: #{model_discriminate_forward.1} parent=71 // pred_fallthru
        _
    $region72: #{model_discriminate_forward.1} parent=5 // pred_fallthru
      _
  $region6: #{model_discriminate_forward.1} parent=0 // loop_footer
    %s21 = sadd.s32 1, %s17
  $region7: #{model_discriminate_forward.1} parent=0 // loop_footer_branch
    %16 = sbr.rel target = $region3
  $region8: #{model_discriminate_forward.1} parent=0 // loop_exit
    _

</llo_original>
